<compile_context>
chip_gen: v7x
topology: tpu7x:2x2x1
jax: 0.10.0
libtpu: 0.0.40
codegen_flags: <defaults>
</compile_context>

<pallas_src>
import functools

import jax
import jax.numpy as jnp
from jax import lax
from jax.experimental import pallas as pl
from jax.experimental.pallas import tpu as pltpu


_INT32_MIN = -(2 ** 31)
_ROT_A = (13, 15, 26, 6)
_ROT_B = (17, 29, 16, 24)
_THREEFRY_C = 466688986  # 0x1BD11BDA (fits in int32)


def _srl32(x, r):
    """Logical right shift of int32 x by static r (arith shift + mask)."""
    return (x >> r) & ((1 << (32 - r)) - 1)


def _rotl32(x, r):
    return (x << r) | _srl32(x, 32 - r)


def _hash_keys(idx, k0, k1):
    """Counter-based 32-bit hash of patch index (Threefry-2x32 style, 12
    rounds, add/xor/rotate only -- every op is a plain VPU int32 op).

    Pointwise in `idx`, so the same key values can be produced directly in
    lane-major (1, N) and sublane-major (N, 1) orientations with no
    cross-lane transpose and no stateful-PRNG lowering dependency.
    """
    ks2 = k0 ^ k1 ^ _THREEFRY_C
    x0 = idx + k0
    x1 = jnp.zeros_like(idx) + k1
    schedule = ((_ROT_A, k1, ks2, 1),
                (_ROT_B, ks2, k0, 2),
                (_ROT_A, k0, k1, 3))
    for rots, inj0, inj1, c in schedule:
        for r in rots:
            x0 = x0 + x1
            x1 = _rotl32(x1, r) ^ x0
        x0 = x0 + inj0
        x1 = x1 + inj1 + c
    return x0 ^ x1


def _patch_keys(idx, k0, k1, idx_bits):
    """Distinct sort keys: random high bits, patch index in the low
    ceil(log2(N_pad)) bits (deterministic tie-break, distribution-preserving,
    and it removes the need for any ==/&/| tie-break terms in the N^2 region).
    """
    h = _hash_keys(idx, k0, k1)
    return (h & (-(1 << idx_bits))) | idx


def _mask_kernel(seeds_ref, o_ref, *, num_patches, num_masks, n_pad, idx_bits):
    """One independent mask row per grid step.

    seeds_ref: (num_rows, 2) int32 in SMEM -- two 32-bit seed words per row.
    o_ref:     (1, 1, n_pad) int8 output block (lane-dense, n_pad % 128 == 0).
    """
    r = pl.program_id(0)
    k0 = seeds_ref[r, 0]
    k1 = seeds_ref[r, 1]

    # Patch indices in both orientations; keys evaluated pointwise in each.
    idx_i = lax.broadcasted_iota(jnp.int32, (1, n_pad), 1)      # lanes
    idx_j = lax.broadcasted_iota(jnp.int32, (n_pad, 1), 0)      # sublanes
    key_i = _patch_keys(idx_i, k0, k1, idx_bits)
    key_j = _patch_keys(idx_j, k0, k1, idx_bits)

    if n_pad != num_patches:
        # Padding patches must never out-rank a real patch.
        key_j = jnp.where(idx_j < num_patches, key_j, _INT32_MIN)

    # Keys are distinct, so one strict compare per (j, i) pair suffices.
    # rank[i] = #patches that beat patch i  ->  a permutation of 0..N-1 over
    # the real patches, so thresholding gives EXACTLY num_masks True entries.
    beats = key_j > key_i                                        # (n_pad, n_pad)
    # Sum over the sublane axis: VALU adds + one intra-vreg reduce, lane-dense
    # (1, n_pad) result matching the output row orientation.
    rank = jnp.sum(beats, axis=0, keepdims=True, dtype=jnp.int32)
    # TODO(synk): for N >= ~512, offload this reduction to the MXU
    #             (bf16 ones @ beats) and j-chunk the compare to bound vregs.
    o_ref[...] = (rank < num_masks).astype(jnp.int8).reshape(o_ref.shape)


@functools.partial(
    jax.jit,
    static_argnames=("height", "width", "num_frames", "mask_ratio", "tube"))
def mask_generator_forward(rng_key, *, height, width, num_frames, mask_ratio,
                           tube=True):
    """JAX/Pallas equivalent of PytorchMaskGeneratorWrapper.forward()."""
    num_patches = height * width
    num_masks = int(mask_ratio * num_patches)
    num_rows = 1 if tube else num_frames            # tube: one shared row
    n_pad = ((num_patches + 127) // 128) * 128      # lane-dense output width
    idx_bits = max(1, (n_pad - 1).bit_length())

    # Two fresh 32-bit seed words per independent row (Threefry-quality
    # decorrelation across rows / calls); only 8 * num_rows bytes enter SMEM.
    seeds = jax.lax.bitcast_convert_type(
        jax.random.bits(rng_key, (num_rows, 2), dtype=jnp.uint32), jnp.int32)

    kernel = functools.partial(
        _mask_kernel, num_patches=num_patches, num_masks=num_masks,
        n_pad=n_pad, idx_bits=idx_bits)

    out = pl.pallas_call(
        kernel,
        grid=(num_rows,),
        in_specs=[pl.BlockSpec(memory_space=pltpu.MemorySpace.SMEM)],
        out_specs=pl.BlockSpec((1, 1, n_pad), lambda r: (r, 0, 0)),
        out_shape=jax.ShapeDtypeStruct((num_rows, 1, n_pad), jnp.int8),
        compiler_params=pltpu.CompilerParams(
            dimension_semantics=("parallel",)),     # v7x: rows split across TCs
    )(seeds)

    mask = out.reshape(num_rows, n_pad)[:, :num_patches]
    if tube:
        # Tube masking: tile the single row over frames OUTSIDE the kernel
        # (free XLA broadcast instead of F redundant int8 stores).
        mask = jnp.broadcast_to(mask, (num_frames, num_patches))
    return mask.reshape(num_frames * num_patches).astype(jnp.bool_)


class PallasMaskGeneratorWrapper:
    """Mirrors PytorchMaskGeneratorWrapper (default: tube masking)."""

    def __init__(self, input_size, mask_ratio, seed=0, tube=True,
                 clumping_factor=1, randomize_num_visible=False):
        # TODO(synk): clumping_factor > 1 and randomize_num_visible paths are
        # not implemented (they change the mask layout / count distribution).
        assert clumping_factor == 1 and not randomize_num_visible
        if isinstance(input_size, int):
            input_size = (input_size,)
        if len(input_size) == 3:
            self.frames, self.height, self.width = input_size
        elif len(input_size) == 2:
            self.frames = None
            self.height, self.width = input_size
        else:
            self.frames = None
            self.height = self.width = input_size[0]
        self.mask_ratio = float(mask_ratio)
        self.tube = tube
        self._key = jax.random.PRNGKey(0 if seed is None else seed)

    def forward(self, num_frames=None, dtype_out=jnp.bool_):
        num_frames = (num_frames or self.frames) or 1
        self._key, sub = jax.random.split(self._key)
        masks = mask_generator_forward(
            sub, height=self.height, width=self.width,
            num_frames=int(num_frames), mask_ratio=self.mask_ratio,
            tube=self.tube)
        return masks.astype(dtype_out)

    __call__ = forward


if __name__ == "__main__":
    key = jax.random.PRNGKey(0)

    # Equivalent of PytorchMaskGeneratorWrapper(TubeMaskingGenerator,
    #                                           input_size=(2, 8, 16),
    #                                           mask_ratio=0.75)
    frames, H, W = 2, 8, 16
    mask_ratio = 0.75
    N = H * W
    num_masks = int(mask_ratio * N)

    # Tube masking (module default): same mask tiled across frames.
    tube_masks = jax.block_until_ready(mask_generator_forward(
        key, height=H, width=W, num_frames=frames, mask_ratio=mask_ratio,
        tube=True))
    assert tube_masks.shape == (frames * N,), tube_masks.shape
    assert tube_masks.dtype == jnp.bool_, tube_masks.dtype
    per_frame = tube_masks.reshape(frames, N)
    assert bool(jnp.all(per_frame.sum(-1) == num_masks)), per_frame.sum(-1)
    assert bool(jnp.all(per_frame[0] == per_frame[1]))  # tube: identical frames

    # Uniform masking: independent mask per frame, still exact counts.
    uni_masks = jax.block_until_ready(mask_generator_forward(
        key, height=H, width=W, num_frames=frames, mask_ratio=mask_ratio,
        tube=False))
    assert uni_masks.shape == (frames * N,), uni_masks.shape
    pu = uni_masks.reshape(frames, N)
    assert bool(jnp.all(pu.sum(-1) == num_masks)), pu.sum(-1)
    assert not bool(jnp.all(pu[0] == pu[1]))  # per-frame masks differ

    # Non-128-multiple patch count (14x14 = 196) exercises the padding path.
    H2 = W2 = 14
    N2 = H2 * W2
    num_masks2 = int(mask_ratio * N2)
    uni2 = jax.block_until_ready(mask_generator_forward(
        jax.random.PRNGKey(1), height=H2, width=W2, num_frames=frames,
        mask_ratio=mask_ratio, tube=False))
    assert uni2.shape == (frames * N2,), uni2.shape
    assert bool(jnp.all(uni2.reshape(frames, N2).sum(-1) == num_masks2))

    # Class-style wrapper mirroring PytorchMaskGeneratorWrapper.forward().
    gen = PallasMaskGeneratorWrapper(
        input_size=(frames, H, W), mask_ratio=mask_ratio, seed=0)
    m = jax.block_until_ready(gen())
    assert m.shape == (frames * N,) and m.dtype == jnp.bool_
    assert bool(jnp.all(m.reshape(frames, N).sum(-1) == num_masks))

    print("KERNEL_OK")
</pallas_src>

<mosaic_0001>
module attributes {stable_mosaic.version = 11 : i64} {
  func.func @_mask_kernel(%arg0: i32, %arg1: memref<1x2xi32, #tpu.memory_space<smem>>, %arg2: memref<1x1x128xi8, #tpu.memory_space<vmem>>) attributes {dimension_semantics = [#tpu.dimension_semantics<parallel>], iteration_bounds = array<i64: 1>, scalar_prefetch = 0 : i64, scratch_operands = 0 : i64, tpu.core_type = #tpu.core_type<tc>, window_params = [{transform_indices = @transform_0, window_bounds = array<i64: 1, 2>}, {transform_indices = @transform_1, window_bounds = array<i64: 1, 1, 128>}]} {
    %0 = arith.index_cast %arg0 : i32 to index
    %c0 = arith.constant 0 : index
    %1 = memref.load %arg1[%0, %c0] : memref<1x2xi32, #tpu.memory_space<smem>>
    %2 = arith.index_cast %arg0 : i32 to index
    %c1 = arith.constant 1 : index
    %3 = memref.load %arg1[%2, %c1] : memref<1x2xi32, #tpu.memory_space<smem>>
    %4 = tpu.iota {dimensions = array<i32: 1>} : vector<1x128xi32>
    %5 = tpu.iota {dimensions = array<i32: 0>} : vector<128x1xi32>
    %6 = arith.xori %1, %3 : i32
    %c466688986_i32 = arith.constant 466688986 : i32
    %7 = arith.xori %6, %c466688986_i32 : i32
    %8 = vector.broadcast %1 : i32 to vector<1x128xi32>
    %9 = arith.addi %4, %8 : vector<1x128xi32>
    %c0_i32 = arith.constant 0 : i32
    %10 = vector.broadcast %c0_i32 : i32 to vector<1x128xi32>
    %11 = vector.broadcast %3 : i32 to vector<1x128xi32>
    %12 = arith.addi %10, %11 : vector<1x128xi32>
    %13 = arith.addi %9, %12 : vector<1x128xi32>
    %c13_i32 = arith.constant 13 : i32
    %14 = vector.broadcast %c13_i32 : i32 to vector<1x128xi32>
    %15 = arith.shli %12, %14 : vector<1x128xi32>
    %c19_i32 = arith.constant 19 : i32
    %16 = vector.broadcast %c19_i32 : i32 to vector<1x128xi32>
    %17 = arith.shrsi %12, %16 : vector<1x128xi32>
    %c8191_i32 = arith.constant 8191 : i32
    %18 = vector.broadcast %c8191_i32 : i32 to vector<1x128xi32>
    %19 = arith.andi %17, %18 : vector<1x128xi32>
    %20 = arith.ori %15, %19 : vector<1x128xi32>
    %21 = arith.xori %20, %13 : vector<1x128xi32>
    %22 = arith.addi %13, %21 : vector<1x128xi32>
    %c15_i32 = arith.constant 15 : i32
    %23 = vector.broadcast %c15_i32 : i32 to vector<1x128xi32>
    %24 = arith.shli %21, %23 : vector<1x128xi32>
    %c17_i32 = arith.constant 17 : i32
    %25 = vector.broadcast %c17_i32 : i32 to vector<1x128xi32>
    %26 = arith.shrsi %21, %25 : vector<1x128xi32>
    %c32767_i32 = arith.constant 32767 : i32
    %27 = vector.broadcast %c32767_i32 : i32 to vector<1x128xi32>
    %28 = arith.andi %26, %27 : vector<1x128xi32>
    %29 = arith.ori %24, %28 : vector<1x128xi32>
    %30 = arith.xori %29, %22 : vector<1x128xi32>
    %31 = arith.addi %22, %30 : vector<1x128xi32>
    %c26_i32 = arith.constant 26 : i32
    %32 = vector.broadcast %c26_i32 : i32 to vector<1x128xi32>
    %33 = arith.shli %30, %32 : vector<1x128xi32>
    %c6_i32 = arith.constant 6 : i32
    %34 = vector.broadcast %c6_i32 : i32 to vector<1x128xi32>
    %35 = arith.shrsi %30, %34 : vector<1x128xi32>
    %c67108863_i32 = arith.constant 67108863 : i32
    %36 = vector.broadcast %c67108863_i32 : i32 to vector<1x128xi32>
    %37 = arith.andi %35, %36 : vector<1x128xi32>
    %38 = arith.ori %33, %37 : vector<1x128xi32>
    %39 = arith.xori %38, %31 : vector<1x128xi32>
    %40 = arith.addi %31, %39 : vector<1x128xi32>
    %c6_i32_0 = arith.constant 6 : i32
    %41 = vector.broadcast %c6_i32_0 : i32 to vector<1x128xi32>
    %42 = arith.shli %39, %41 : vector<1x128xi32>
    %c26_i32_1 = arith.constant 26 : i32
    %43 = vector.broadcast %c26_i32_1 : i32 to vector<1x128xi32>
    %44 = arith.shrsi %39, %43 : vector<1x128xi32>
    %c63_i32 = arith.constant 63 : i32
    %45 = vector.broadcast %c63_i32 : i32 to vector<1x128xi32>
    %46 = arith.andi %44, %45 : vector<1x128xi32>
    %47 = arith.ori %42, %46 : vector<1x128xi32>
    %48 = arith.xori %47, %40 : vector<1x128xi32>
    %49 = vector.broadcast %3 : i32 to vector<1x128xi32>
    %50 = arith.addi %40, %49 : vector<1x128xi32>
    %51 = vector.broadcast %7 : i32 to vector<1x128xi32>
    %52 = arith.addi %48, %51 : vector<1x128xi32>
    %c1_i32 = arith.constant 1 : i32
    %53 = vector.broadcast %c1_i32 : i32 to vector<1x128xi32>
    %54 = arith.addi %52, %53 : vector<1x128xi32>
    %55 = arith.addi %50, %54 : vector<1x128xi32>
    %c17_i32_2 = arith.constant 17 : i32
    %56 = vector.broadcast %c17_i32_2 : i32 to vector<1x128xi32>
    %57 = arith.shli %54, %56 : vector<1x128xi32>
    %c15_i32_3 = arith.constant 15 : i32
    %58 = vector.broadcast %c15_i32_3 : i32 to vector<1x128xi32>
    %59 = arith.shrsi %54, %58 : vector<1x128xi32>
    %c131071_i32 = arith.constant 131071 : i32
    %60 = vector.broadcast %c131071_i32 : i32 to vector<1x128xi32>
    %61 = arith.andi %59, %60 : vector<1x128xi32>
    %62 = arith.ori %57, %61 : vector<1x128xi32>
    %63 = arith.xori %62, %55 : vector<1x128xi32>
    %64 = arith.addi %55, %63 : vector<1x128xi32>
    %c29_i32 = arith.constant 29 : i32
    %65 = vector.broadcast %c29_i32 : i32 to vector<1x128xi32>
    %66 = arith.shli %63, %65 : vector<1x128xi32>
    %c3_i32 = arith.constant 3 : i32
    %67 = vector.broadcast %c3_i32 : i32 to vector<1x128xi32>
    %68 = arith.shrsi %63, %67 : vector<1x128xi32>
    %c536870911_i32 = arith.constant 536870911 : i32
    %69 = vector.broadcast %c536870911_i32 : i32 to vector<1x128xi32>
    %70 = arith.andi %68, %69 : vector<1x128xi32>
    %71 = arith.ori %66, %70 : vector<1x128xi32>
    %72 = arith.xori %71, %64 : vector<1x128xi32>
    %73 = arith.addi %64, %72 : vector<1x128xi32>
    %c16_i32 = arith.constant 16 : i32
    %74 = vector.broadcast %c16_i32 : i32 to vector<1x128xi32>
    %75 = arith.shli %72, %74 : vector<1x128xi32>
    %c16_i32_4 = arith.constant 16 : i32
    %76 = vector.broadcast %c16_i32_4 : i32 to vector<1x128xi32>
    %77 = arith.shrsi %72, %76 : vector<1x128xi32>
    %c65535_i32 = arith.constant 65535 : i32
    %78 = vector.broadcast %c65535_i32 : i32 to vector<1x128xi32>
    %79 = arith.andi %77, %78 : vector<1x128xi32>
    %80 = arith.ori %75, %79 : vector<1x128xi32>
    %81 = arith.xori %80, %73 : vector<1x128xi32>
    %82 = arith.addi %73, %81 : vector<1x128xi32>
    %c24_i32 = arith.constant 24 : i32
    %83 = vector.broadcast %c24_i32 : i32 to vector<1x128xi32>
    %84 = arith.shli %81, %83 : vector<1x128xi32>
    %c8_i32 = arith.constant 8 : i32
    %85 = vector.broadcast %c8_i32 : i32 to vector<1x128xi32>
    %86 = arith.shrsi %81, %85 : vector<1x128xi32>
    %c16777215_i32 = arith.constant 16777215 : i32
    %87 = vector.broadcast %c16777215_i32 : i32 to vector<1x128xi32>
    %88 = arith.andi %86, %87 : vector<1x128xi32>
    %89 = arith.ori %84, %88 : vector<1x128xi32>
    %90 = arith.xori %89, %82 : vector<1x128xi32>
    %91 = vector.broadcast %7 : i32 to vector<1x128xi32>
    %92 = arith.addi %82, %91 : vector<1x128xi32>
    %93 = vector.broadcast %1 : i32 to vector<1x128xi32>
    %94 = arith.addi %90, %93 : vector<1x128xi32>
    %c2_i32 = arith.constant 2 : i32
    %95 = vector.broadcast %c2_i32 : i32 to vector<1x128xi32>
    %96 = arith.addi %94, %95 : vector<1x128xi32>
    %97 = arith.addi %92, %96 : vector<1x128xi32>
    %c13_i32_5 = arith.constant 13 : i32
    %98 = vector.broadcast %c13_i32_5 : i32 to vector<1x128xi32>
    %99 = arith.shli %96, %98 : vector<1x128xi32>
    %c19_i32_6 = arith.constant 19 : i32
    %100 = vector.broadcast %c19_i32_6 : i32 to vector<1x128xi32>
    %101 = arith.shrsi %96, %100 : vector<1x128xi32>
    %c8191_i32_7 = arith.constant 8191 : i32
    %102 = vector.broadcast %c8191_i32_7 : i32 to vector<1x128xi32>
    %103 = arith.andi %101, %102 : vector<1x128xi32>
    %104 = arith.ori %99, %103 : vector<1x128xi32>
    %105 = arith.xori %104, %97 : vector<1x128xi32>
    %106 = arith.addi %97, %105 : vector<1x128xi32>
    %c15_i32_8 = arith.constant 15 : i32
    %107 = vector.broadcast %c15_i32_8 : i32 to vector<1x128xi32>
    %108 = arith.shli %105, %107 : vector<1x128xi32>
    %c17_i32_9 = arith.constant 17 : i32
    %109 = vector.broadcast %c17_i32_9 : i32 to vector<1x128xi32>
    %110 = arith.shrsi %105, %109 : vector<1x128xi32>
    %c32767_i32_10 = arith.constant 32767 : i32
    %111 = vector.broadcast %c32767_i32_10 : i32 to vector<1x128xi32>
    %112 = arith.andi %110, %111 : vector<1x128xi32>
    %113 = arith.ori %108, %112 : vector<1x128xi32>
    %114 = arith.xori %113, %106 : vector<1x128xi32>
    %115 = arith.addi %106, %114 : vector<1x128xi32>
    %c26_i32_11 = arith.constant 26 : i32
    %116 = vector.broadcast %c26_i32_11 : i32 to vector<1x128xi32>
    %117 = arith.shli %114, %116 : vector<1x128xi32>
    %c6_i32_12 = arith.constant 6 : i32
    %118 = vector.broadcast %c6_i32_12 : i32 to vector<1x128xi32>
    %119 = arith.shrsi %114, %118 : vector<1x128xi32>
    %c67108863_i32_13 = arith.constant 67108863 : i32
    %120 = vector.broadcast %c67108863_i32_13 : i32 to vector<1x128xi32>
    %121 = arith.andi %119, %120 : vector<1x128xi32>
    %122 = arith.ori %117, %121 : vector<1x128xi32>
    %123 = arith.xori %122, %115 : vector<1x128xi32>
    %124 = arith.addi %115, %123 : vector<1x128xi32>
    %c6_i32_14 = arith.constant 6 : i32
    %125 = vector.broadcast %c6_i32_14 : i32 to vector<1x128xi32>
    %126 = arith.shli %123, %125 : vector<1x128xi32>
    %c26_i32_15 = arith.constant 26 : i32
    %127 = vector.broadcast %c26_i32_15 : i32 to vector<1x128xi32>
    %128 = arith.shrsi %123, %127 : vector<1x128xi32>
    %c63_i32_16 = arith.constant 63 : i32
    %129 = vector.broadcast %c63_i32_16 : i32 to vector<1x128xi32>
    %130 = arith.andi %128, %129 : vector<1x128xi32>
    %131 = arith.ori %126, %130 : vector<1x128xi32>
    %132 = arith.xori %131, %124 : vector<1x128xi32>
    %133 = vector.broadcast %1 : i32 to vector<1x128xi32>
    %134 = arith.addi %124, %133 : vector<1x128xi32>
    %135 = vector.broadcast %3 : i32 to vector<1x128xi32>
    %136 = arith.addi %132, %135 : vector<1x128xi32>
    %c3_i32_17 = arith.constant 3 : i32
    %137 = vector.broadcast %c3_i32_17 : i32 to vector<1x128xi32>
    %138 = arith.addi %136, %137 : vector<1x128xi32>
    %139 = arith.xori %134, %138 : vector<1x128xi32>
    %c-128_i32 = arith.constant -128 : i32
    %140 = vector.broadcast %c-128_i32 : i32 to vector<1x128xi32>
    %141 = arith.andi %139, %140 : vector<1x128xi32>
    %142 = arith.ori %141, %4 : vector<1x128xi32>
    %143 = arith.xori %1, %3 : i32
    %c466688986_i32_18 = arith.constant 466688986 : i32
    %144 = arith.xori %143, %c466688986_i32_18 : i32
    %145 = vector.broadcast %1 : i32 to vector<128x1xi32>
    %146 = arith.addi %5, %145 : vector<128x1xi32>
    %c0_i32_19 = arith.constant 0 : i32
    %147 = vector.broadcast %c0_i32_19 : i32 to vector<128x1xi32>
    %148 = vector.broadcast %3 : i32 to vector<128x1xi32>
    %149 = arith.addi %147, %148 : vector<128x1xi32>
    %150 = arith.addi %146, %149 : vector<128x1xi32>
    %c13_i32_20 = arith.constant 13 : i32
    %151 = vector.broadcast %c13_i32_20 : i32 to vector<128x1xi32>
    %152 = arith.shli %149, %151 : vector<128x1xi32>
    %c19_i32_21 = arith.constant 19 : i32
    %153 = vector.broadcast %c19_i32_21 : i32 to vector<128x1xi32>
    %154 = arith.shrsi %149, %153 : vector<128x1xi32>
    %c8191_i32_22 = arith.constant 8191 : i32
    %155 = vector.broadcast %c8191_i32_22 : i32 to vector<128x1xi32>
    %156 = arith.andi %154, %155 : vector<128x1xi32>
    %157 = arith.ori %152, %156 : vector<128x1xi32>
    %158 = arith.xori %157, %150 : vector<128x1xi32>
    %159 = arith.addi %150, %158 : vector<128x1xi32>
    %c15_i32_23 = arith.constant 15 : i32
    %160 = vector.broadcast %c15_i32_23 : i32 to vector<128x1xi32>
    %161 = arith.shli %158, %160 : vector<128x1xi32>
    %c17_i32_24 = arith.constant 17 : i32
    %162 = vector.broadcast %c17_i32_24 : i32 to vector<128x1xi32>
    %163 = arith.shrsi %158, %162 : vector<128x1xi32>
    %c32767_i32_25 = arith.constant 32767 : i32
    %164 = vector.broadcast %c32767_i32_25 : i32 to vector<128x1xi32>
    %165 = arith.andi %163, %164 : vector<128x1xi32>
    %166 = arith.ori %161, %165 : vector<128x1xi32>
    %167 = arith.xori %166, %159 : vector<128x1xi32>
    %168 = arith.addi %159, %167 : vector<128x1xi32>
    %c26_i32_26 = arith.constant 26 : i32
    %169 = vector.broadcast %c26_i32_26 : i32 to vector<128x1xi32>
    %170 = arith.shli %167, %169 : vector<128x1xi32>
    %c6_i32_27 = arith.constant 6 : i32
    %171 = vector.broadcast %c6_i32_27 : i32 to vector<128x1xi32>
    %172 = arith.shrsi %167, %171 : vector<128x1xi32>
    %c67108863_i32_28 = arith.constant 67108863 : i32
    %173 = vector.broadcast %c67108863_i32_28 : i32 to vector<128x1xi32>
    %174 = arith.andi %172, %173 : vector<128x1xi32>
    %175 = arith.ori %170, %174 : vector<128x1xi32>
    %176 = arith.xori %175, %168 : vector<128x1xi32>
    %177 = arith.addi %168, %176 : vector<128x1xi32>
    %c6_i32_29 = arith.constant 6 : i32
    %178 = vector.broadcast %c6_i32_29 : i32 to vector<128x1xi32>
    %179 = arith.shli %176, %178 : vector<128x1xi32>
    %c26_i32_30 = arith.constant 26 : i32
    %180 = vector.broadcast %c26_i32_30 : i32 to vector<128x1xi32>
    %181 = arith.shrsi %176, %180 : vector<128x1xi32>
    %c63_i32_31 = arith.constant 63 : i32
    %182 = vector.broadcast %c63_i32_31 : i32 to vector<128x1xi32>
    %183 = arith.andi %181, %182 : vector<128x1xi32>
    %184 = arith.ori %179, %183 : vector<128x1xi32>
    %185 = arith.xori %184, %177 : vector<128x1xi32>
    %186 = vector.broadcast %3 : i32 to vector<128x1xi32>
    %187 = arith.addi %177, %186 : vector<128x1xi32>
    %188 = vector.broadcast %144 : i32 to vector<128x1xi32>
    %189 = arith.addi %185, %188 : vector<128x1xi32>
    %c1_i32_32 = arith.constant 1 : i32
    %190 = vector.broadcast %c1_i32_32 : i32 to vector<128x1xi32>
    %191 = arith.addi %189, %190 : vector<128x1xi32>
    %192 = arith.addi %187, %191 : vector<128x1xi32>
    %c17_i32_33 = arith.constant 17 : i32
    %193 = vector.broadcast %c17_i32_33 : i32 to vector<128x1xi32>
    %194 = arith.shli %191, %193 : vector<128x1xi32>
    %c15_i32_34 = arith.constant 15 : i32
    %195 = vector.broadcast %c15_i32_34 : i32 to vector<128x1xi32>
    %196 = arith.shrsi %191, %195 : vector<128x1xi32>
    %c131071_i32_35 = arith.constant 131071 : i32
    %197 = vector.broadcast %c131071_i32_35 : i32 to vector<128x1xi32>
    %198 = arith.andi %196, %197 : vector<128x1xi32>
    %199 = arith.ori %194, %198 : vector<128x1xi32>
    %200 = arith.xori %199, %192 : vector<128x1xi32>
    %201 = arith.addi %192, %200 : vector<128x1xi32>
    %c29_i32_36 = arith.constant 29 : i32
    %202 = vector.broadcast %c29_i32_36 : i32 to vector<128x1xi32>
    %203 = arith.shli %200, %202 : vector<128x1xi32>
    %c3_i32_37 = arith.constant 3 : i32
    %204 = vector.broadcast %c3_i32_37 : i32 to vector<128x1xi32>
    %205 = arith.shrsi %200, %204 : vector<128x1xi32>
    %c536870911_i32_38 = arith.constant 536870911 : i32
    %206 = vector.broadcast %c536870911_i32_38 : i32 to vector<128x1xi32>
    %207 = arith.andi %205, %206 : vector<128x1xi32>
    %208 = arith.ori %203, %207 : vector<128x1xi32>
    %209 = arith.xori %208, %201 : vector<128x1xi32>
    %210 = arith.addi %201, %209 : vector<128x1xi32>
    %c16_i32_39 = arith.constant 16 : i32
    %211 = vector.broadcast %c16_i32_39 : i32 to vector<128x1xi32>
    %212 = arith.shli %209, %211 : vector<128x1xi32>
    %c16_i32_40 = arith.constant 16 : i32
    %213 = vector.broadcast %c16_i32_40 : i32 to vector<128x1xi32>
    %214 = arith.shrsi %209, %213 : vector<128x1xi32>
    %c65535_i32_41 = arith.constant 65535 : i32
    %215 = vector.broadcast %c65535_i32_41 : i32 to vector<128x1xi32>
    %216 = arith.andi %214, %215 : vector<128x1xi32>
    %217 = arith.ori %212, %216 : vector<128x1xi32>
    %218 = arith.xori %217, %210 : vector<128x1xi32>
    %219 = arith.addi %210, %218 : vector<128x1xi32>
    %c24_i32_42 = arith.constant 24 : i32
    %220 = vector.broadcast %c24_i32_42 : i32 to vector<128x1xi32>
    %221 = arith.shli %218, %220 : vector<128x1xi32>
    %c8_i32_43 = arith.constant 8 : i32
    %222 = vector.broadcast %c8_i32_43 : i32 to vector<128x1xi32>
    %223 = arith.shrsi %218, %222 : vector<128x1xi32>
    %c16777215_i32_44 = arith.constant 16777215 : i32
    %224 = vector.broadcast %c16777215_i32_44 : i32 to vector<128x1xi32>
    %225 = arith.andi %223, %224 : vector<128x1xi32>
    %226 = arith.ori %221, %225 : vector<128x1xi32>
    %227 = arith.xori %226, %219 : vector<128x1xi32>
    %228 = vector.broadcast %144 : i32 to vector<128x1xi32>
    %229 = arith.addi %219, %228 : vector<128x1xi32>
    %230 = vector.broadcast %1 : i32 to vector<128x1xi32>
    %231 = arith.addi %227, %230 : vector<128x1xi32>
    %c2_i32_45 = arith.constant 2 : i32
    %232 = vector.broadcast %c2_i32_45 : i32 to vector<128x1xi32>
    %233 = arith.addi %231, %232 : vector<128x1xi32>
    %234 = arith.addi %229, %233 : vector<128x1xi32>
    %c13_i32_46 = arith.constant 13 : i32
    %235 = vector.broadcast %c13_i32_46 : i32 to vector<128x1xi32>
    %236 = arith.shli %233, %235 : vector<128x1xi32>
    %c19_i32_47 = arith.constant 19 : i32
    %237 = vector.broadcast %c19_i32_47 : i32 to vector<128x1xi32>
    %238 = arith.shrsi %233, %237 : vector<128x1xi32>
    %c8191_i32_48 = arith.constant 8191 : i32
    %239 = vector.broadcast %c8191_i32_48 : i32 to vector<128x1xi32>
    %240 = arith.andi %238, %239 : vector<128x1xi32>
    %241 = arith.ori %236, %240 : vector<128x1xi32>
    %242 = arith.xori %241, %234 : vector<128x1xi32>
    %243 = arith.addi %234, %242 : vector<128x1xi32>
    %c15_i32_49 = arith.constant 15 : i32
    %244 = vector.broadcast %c15_i32_49 : i32 to vector<128x1xi32>
    %245 = arith.shli %242, %244 : vector<128x1xi32>
    %c17_i32_50 = arith.constant 17 : i32
    %246 = vector.broadcast %c17_i32_50 : i32 to vector<128x1xi32>
    %247 = arith.shrsi %242, %246 : vector<128x1xi32>
    %c32767_i32_51 = arith.constant 32767 : i32
    %248 = vector.broadcast %c32767_i32_51 : i32 to vector<128x1xi32>
    %249 = arith.andi %247, %248 : vector<128x1xi32>
    %250 = arith.ori %245, %249 : vector<128x1xi32>
    %251 = arith.xori %250, %243 : vector<128x1xi32>
    %252 = arith.addi %243, %251 : vector<128x1xi32>
    %c26_i32_52 = arith.constant 26 : i32
    %253 = vector.broadcast %c26_i32_52 : i32 to vector<128x1xi32>
    %254 = arith.shli %251, %253 : vector<128x1xi32>
    %c6_i32_53 = arith.constant 6 : i32
    %255 = vector.broadcast %c6_i32_53 : i32 to vector<128x1xi32>
    %256 = arith.shrsi %251, %255 : vector<128x1xi32>
    %c67108863_i32_54 = arith.constant 67108863 : i32
    %257 = vector.broadcast %c67108863_i32_54 : i32 to vector<128x1xi32>
    %258 = arith.andi %256, %257 : vector<128x1xi32>
    %259 = arith.ori %254, %258 : vector<128x1xi32>
    %260 = arith.xori %259, %252 : vector<128x1xi32>
    %261 = arith.addi %252, %260 : vector<128x1xi32>
    %c6_i32_55 = arith.constant 6 : i32
    %262 = vector.broadcast %c6_i32_55 : i32 to vector<128x1xi32>
    %263 = arith.shli %260, %262 : vector<128x1xi32>
    %c26_i32_56 = arith.constant 26 : i32
    %264 = vector.broadcast %c26_i32_56 : i32 to vector<128x1xi32>
    %265 = arith.shrsi %260, %264 : vector<128x1xi32>
    %c63_i32_57 = arith.constant 63 : i32
    %266 = vector.broadcast %c63_i32_57 : i32 to vector<128x1xi32>
    %267 = arith.andi %265, %266 : vector<128x1xi32>
    %268 = arith.ori %263, %267 : vector<128x1xi32>
    %269 = arith.xori %268, %261 : vector<128x1xi32>
    %270 = vector.broadcast %1 : i32 to vector<128x1xi32>
    %271 = arith.addi %261, %270 : vector<128x1xi32>
    %272 = vector.broadcast %3 : i32 to vector<128x1xi32>
    %273 = arith.addi %269, %272 : vector<128x1xi32>
    %c3_i32_58 = arith.constant 3 : i32
    %274 = vector.broadcast %c3_i32_58 : i32 to vector<128x1xi32>
    %275 = arith.addi %273, %274 : vector<128x1xi32>
    %276 = arith.xori %271, %275 : vector<128x1xi32>
    %c-128_i32_59 = arith.constant -128 : i32
    %277 = vector.broadcast %c-128_i32_59 : i32 to vector<128x1xi32>
    %278 = arith.andi %276, %277 : vector<128x1xi32>
    %279 = arith.ori %278, %5 : vector<128x1xi32>
    %280 = vector.broadcast %279 : vector<128x1xi32> to vector<128x128xi32>
    %281 = vector.broadcast %142 : vector<1x128xi32> to vector<128x128xi32>
    %282 = arith.cmpi sgt, %280, %281 : vector<128x128xi32>
    %283 = arith.extui %282 : vector<128x128xi1> to vector<128x128xi32>
    %cst = arith.constant dense<0> : vector<128xi32>
    %284 = vector.multi_reduction <add>, %283, %cst [0] : vector<128x128xi32> to vector<128xi32>
    %285 = vector.shape_cast %284 : vector<128xi32> to vector<1x128xi32>
    %c96_i32 = arith.constant 96 : i32
    %286 = vector.broadcast %c96_i32 : i32 to vector<1x128xi32>
    %287 = arith.cmpi slt, %285, %286 : vector<1x128xi32>
    %288 = arith.extui %287 : vector<1x128xi1> to vector<1x128xi8>
    %289 = vector.shape_cast %288 : vector<1x128xi8> to vector<1x1x128xi8>
    %c0_60 = arith.constant 0 : index
    %c0_61 = arith.constant 0 : index
    %c0_62 = arith.constant 0 : index
    %290 = vector.load %arg2[%c0_60, %c0_61, %c0_62] : memref<1x1x128xi8, #tpu.memory_space<vmem>>, vector<1x1x128xi8>
    tpu.vector_store %arg2[%c0_60, %c0_61, %c0_62], %289 {strides = array<i32>} : memref<1x1x128xi8, #tpu.memory_space<vmem>>, vector<1x1x128xi8>,
    return
  }
  func.func @transform_0(%arg0: i32) -> (i32, i32) {
    %c0_i32 = arith.constant 0 : i32
    %c0_i32_0 = arith.constant 0 : i32
    %c0_i32_1 = arith.constant 0 : i32
    return %c0_i32, %c0_i32_0 : i32, i32
  }
  func.func @transform_1(%arg0: i32) -> (i32, i32, i32) {
    %c0_i32 = arith.constant 0 : i32
    %c0_i32_0 = arith.constant 0 : i32
    %c0_i32_1 = arith.constant 0 : i32
    return %arg0, %c0_i32, %c0_i32_0 : i32, i32, i32
  }
}

</mosaic_0001>

<llo_original>
// kernel: mask_generator_forward.1
$region0: #{mask_generator_forward.1}
  #allocation0 [shape = 'u32[]', space=smem, size = 0x4, offset = 0x4, fixed_abs, tag = 'smem constant byte address 0x4 - core index']
  #allocation1 [shape = 'u32[144,128]{1,0:T(1,128)}', space=vmem, size = 0x12000, scoped, tag = 'internal scratch']
  %s0 = inlined_call_operand.vmem [shape: s32[1,2], index: 0, kind: input, shape index: {}]
  %s1 = inlined_call_operand.vmem [shape: s8[1,1,128], index: 1, kind: output, shape index: {}]
  %s2 = sld [smem:[#allocation0]]
  $region18: #{mask_generator_forward.1} parent=0
    _
  %s4 = ssub.s32 1, %s2
  %s5 = scalar_select 0, %s4, %s2
  $region1: #{mask_generator_forward.1} parent=0
    #allocation2 [shape = 'u8[512]{0}', space=smem, size = 0x200, scoped, tag = 'input window, operand 0, single buffered']
    #allocation3 [shape = 's32[1]{0}', space=sflag, size = 0x4, scoped, tag = 'scoped memory for mask_generator_forward.1']
    %6 = vsyncpa [#allocation3], 0
    // Predicated region
    $region2: #{mask_generator_forward.1} parent=1 // pred_check
      _
    $region3: #{mask_generator_forward.1} parent=1 // pred_check_branch
      %8 = sbr.rel (0) target = $region5
    $region4: #{mask_generator_forward.1} parent=1 // pred_region
      %s10 = ssub.s32 16, 16
      %11 = vsyncadd [#allocation3], %s10
      %s13 = sshll.u32 %s0, 4
      %s14 = int_to_ptr.vmem [resolvable:$true] %s13
      %16 = dma.vmem_to_smem %s14, 16, [#allocation2], [#allocation3]
    $region5: #{mask_generator_forward.1} parent=1 // pred_fallthru
      _
    // Predicated region
    $region6: #{mask_generator_forward.1} parent=1 // pred_check
      _
    $region7: #{mask_generator_forward.1} parent=1 // pred_check_branch
      %18 = sbr.rel (0) target = $region9
    $region8: #{mask_generator_forward.1} parent=1 // pred_region
      %19 = dma.done [#allocation3], 16
    $region9: #{mask_generator_forward.1} parent=1 // pred_fallthru
      _
    %20 = sfence
    %s23 = smul.u32 0, 128
    %s24 = sld [smem:[#allocation2 + %s23]]
    %s25 = sadd.s32 %s23, 1
    %s26 = sld [smem:[#allocation2 + %s25]]
    %v27 = vlaneseq
    %v28 = vand.u32 %v27, 127
    %v29 = vlaneseq
    %v30 = vshrl.u32 %v29, 7
    %v31 = vadd.s32 %v30, 8
    %v32 = vadd.s32 %v30, 16
    %v33 = vadd.s32 %v30, 24
    %v34 = vadd.s32 %v30, 32
    %v35 = vadd.s32 %v30, 40
    %v36 = vadd.s32 %v30, 48
    %v37 = vadd.s32 %v30, 56
    %v38 = vadd.s32 %v30, 64
    %v39 = vadd.s32 %v30, 72
    %v40 = vadd.s32 %v30, 80
    %v41 = vadd.s32 %v30, 88
    %v42 = vadd.s32 %v30, 96
    %v43 = vadd.s32 %v30, 104
    %v44 = vadd.s32 %v30, 112
    %v45 = vadd.s32 %v30, 120
    %s46 = sxor.u32 %s24, %s26
    %s47 = sxor.u32 %s46, 466688986
    %v48 = vstv %s24
    %v49 = vadd.s32 %v28, %v48
    %v50 = vstv %s26
    %v51 = vadd.s32 %v49, %v50
    %v52 = vshll.u32 %v50, 13
    %v53 = vshra.s32 %v50, 19
    %v54 = vand.u32 %v53, 8191
    %v55 = vor.u32 %v52, %v54
    %v56 = vxor.u32 %v55, %v51
    %v57 = vadd.s32 %v51, %v56
    %v58 = vshll.u32 %v56, 15
    %v59 = vshra.s32 %v56, 17
    %v60 = vand.u32 %v59, 32767
    %v61 = vor.u32 %v58, %v60
    %v62 = vxor.u32 %v61, %v57
    %v63 = vadd.s32 %v57, %v62
    %v64 = vshll.u32 %v62, 26
    %v65 = vshra.s32 %v62, 6
    %v66 = vand.u32 %v65, 67108863
    %v67 = vor.u32 %v64, %v66
    %v68 = vxor.u32 %v67, %v63
    %v69 = vadd.s32 %v63, %v68
    %v70 = vshll.u32 %v68, 6
    %v71 = vshra.s32 %v68, 26
    %v72 = vand.u32 %v71, 63
    %v73 = vor.u32 %v70, %v72
    %v74 = vxor.u32 %v73, %v69
    %v75 = vadd.s32 %v69, %v50
    %v76 = vstv %s47
    %v77 = vadd.s32 %v74, %v76
    %v78 = vadd.s32 %v77, 1
    %v79 = vadd.s32 %v75, %v78
    %v80 = vshll.u32 %v78, 17
    %v81 = vshra.s32 %v78, 15
    %v82 = vand.u32 %v81, 131071
    %v83 = vor.u32 %v80, %v82
    %v84 = vxor.u32 %v83, %v79
    %v85 = vadd.s32 %v79, %v84
    %v86 = vshll.u32 %v84, 29
    %v87 = vshra.s32 %v84, 3
    %v88 = vand.u32 %v87, 536870911
    %v89 = vor.u32 %v86, %v88
    %v90 = vxor.u32 %v89, %v85
    %v91 = vadd.s32 %v85, %v90
    %v92 = vshll.u32 %v90, 16
    %v93 = vshra.s32 %v90, 16
    %v94 = vand.u32 %v93, 65535
    %v95 = vor.u32 %v92, %v94
    %v96 = vxor.u32 %v95, %v91
    %v97 = vadd.s32 %v91, %v96
    %v98 = vshll.u32 %v96, 24
    %v99 = vshra.s32 %v96, 8
    %v100 = vand.u32 %v99, 16777215
    %v101 = vor.u32 %v98, %v100
    %v102 = vxor.u32 %v101, %v97
    %v103 = vadd.s32 %v97, %v76
    %v104 = vadd.s32 %v102, %v48
    %v105 = vadd.s32 %v104, 2
    %v106 = vadd.s32 %v103, %v105
    %v107 = vshll.u32 %v105, 13
    %v108 = vshra.s32 %v105, 19
    %v109 = vand.u32 %v108, 8191
    %v110 = vor.u32 %v107, %v109
    %v111 = vxor.u32 %v110, %v106
    %v112 = vadd.s32 %v106, %v111
    %v113 = vshll.u32 %v111, 15
    %v114 = vshra.s32 %v111, 17
    %v115 = vand.u32 %v114, 32767
    %v116 = vor.u32 %v113, %v115
    %v117 = vxor.u32 %v116, %v112
    %v118 = vadd.s32 %v112, %v117
    %v119 = vshll.u32 %v117, 26
    %v120 = vshra.s32 %v117, 6
    %v121 = vand.u32 %v120, 67108863
    %v122 = vor.u32 %v119, %v121
    %v123 = vxor.u32 %v122, %v118
    %v124 = vadd.s32 %v118, %v123
    %v125 = vshll.u32 %v123, 6
    %v126 = vshra.s32 %v123, 26
    %v127 = vand.u32 %v126, 63
    %v128 = vor.u32 %v125, %v127
    %v129 = vxor.u32 %v128, %v124
    %v130 = vadd.s32 %v124, %v48
    %v131 = vadd.s32 %v129, %v50
    %v132 = vadd.s32 %v131, 3
    %v133 = vxor.u32 %v130, %v132
    %v134 = vand.u32 %v133, 4294967168
    %v135 = vor.u32 %v134, %v28
    %v136 = vadd.s32 %v30, %v48
    %v137 = vadd.s32 %v31, %v48
    %v138 = vadd.s32 %v32, %v48
    %v139 = vadd.s32 %v33, %v48
    %v140 = vadd.s32 %v34, %v48
    %v141 = vadd.s32 %v35, %v48
    %v142 = vadd.s32 %v36, %v48
    %v143 = vadd.s32 %v37, %v48
    %v144 = vadd.s32 %v38, %v48
    %v145 = vadd.s32 %v39, %v48
    %v146 = vadd.s32 %v40, %v48
    %v147 = vadd.s32 %v41, %v48
    %v148 = vadd.s32 %v42, %v48
    %v149 = vadd.s32 %v43, %v48
    %v150 = vadd.s32 %v44, %v48
    %v151 = vadd.s32 %v45, %v48
    %v152 = vadd.s32 %v136, %v50
    %v153 = vadd.s32 %v137, %v50
    %v154 = vadd.s32 %v138, %v50
    %v155 = vadd.s32 %v139, %v50
    %v156 = vadd.s32 %v140, %v50
    %v157 = vadd.s32 %v141, %v50
    %v158 = vadd.s32 %v142, %v50
    %v159 = vadd.s32 %v143, %v50
    %v160 = vadd.s32 %v144, %v50
    %v161 = vadd.s32 %v145, %v50
    %v162 = vadd.s32 %v146, %v50
    %v163 = vadd.s32 %v147, %v50
    %v164 = vadd.s32 %v148, %v50
    %v165 = vadd.s32 %v149, %v50
    %v166 = vadd.s32 %v150, %v50
    %v167 = vadd.s32 %v151, %v50
    %v168 = vxor.u32 %v55, %v152
    %v169 = vxor.u32 %v55, %v153
    %v170 = vxor.u32 %v55, %v154
    %v171 = vxor.u32 %v55, %v155
    %v172 = vxor.u32 %v55, %v156
    %v173 = vxor.u32 %v55, %v157
    %v174 = vxor.u32 %v55, %v158
    %v175 = vxor.u32 %v55, %v159
    %v176 = vxor.u32 %v55, %v160
    %v177 = vxor.u32 %v55, %v161
    %v178 = vxor.u32 %v55, %v162
    %v179 = vxor.u32 %v55, %v163
    %v180 = vxor.u32 %v55, %v164
    %v181 = vxor.u32 %v55, %v165
    %v182 = vxor.u32 %v55, %v166
    %v183 = vxor.u32 %v55, %v167
    %v184 = vadd.s32 %v152, %v168
    %v185 = vadd.s32 %v153, %v169
    %v186 = vadd.s32 %v154, %v170
    %v187 = vadd.s32 %v155, %v171
    %v188 = vadd.s32 %v156, %v172
    %v189 = vadd.s32 %v157, %v173
    %v190 = vadd.s32 %v158, %v174
    %v191 = vadd.s32 %v159, %v175
    %v192 = vadd.s32 %v160, %v176
    %v193 = vadd.s32 %v161, %v177
    %v194 = vadd.s32 %v162, %v178
    %v195 = vadd.s32 %v163, %v179
    %v196 = vadd.s32 %v164, %v180
    %v197 = vadd.s32 %v165, %v181
    %v198 = vadd.s32 %v166, %v182
    %v199 = vadd.s32 %v167, %v183
    %v200 = vshll.u32 %v168, 15
    %v201 = vshll.u32 %v169, 15
    %v202 = vshll.u32 %v170, 15
    %v203 = vshll.u32 %v171, 15
    %v204 = vshll.u32 %v172, 15
    %v205 = vshll.u32 %v173, 15
    %v206 = vshll.u32 %v174, 15
    %v207 = vshll.u32 %v175, 15
    %v208 = vshll.u32 %v176, 15
    %v209 = vshll.u32 %v177, 15
    %v210 = vshll.u32 %v178, 15
    %v211 = vshll.u32 %v179, 15
    %v212 = vshll.u32 %v180, 15
    %v213 = vshll.u32 %v181, 15
    %v214 = vshll.u32 %v182, 15
    %v215 = vshll.u32 %v183, 15
    %v216 = vshra.s32 %v168, 17
    %v217 = vshra.s32 %v169, 17
    %v218 = vshra.s32 %v170, 17
    %v219 = vshra.s32 %v171, 17
    %v220 = vshra.s32 %v172, 17
    %v221 = vshra.s32 %v173, 17
    %v222 = vshra.s32 %v174, 17
    %v223 = vshra.s32 %v175, 17
    %v224 = vshra.s32 %v176, 17
    %v225 = vshra.s32 %v177, 17
    %v226 = vshra.s32 %v178, 17
    %v227 = vshra.s32 %v179, 17
    %v228 = vshra.s32 %v180, 17
    %v229 = vshra.s32 %v181, 17
    %v230 = vshra.s32 %v182, 17
    %v231 = vshra.s32 %v183, 17
    %v232 = vand.u32 %v216, 32767
    %v233 = vand.u32 %v217, 32767
    %v234 = vand.u32 %v218, 32767
    %v235 = vand.u32 %v219, 32767
    %v236 = vand.u32 %v220, 32767
    %v237 = vand.u32 %v221, 32767
    %v238 = vand.u32 %v222, 32767
    %v239 = vand.u32 %v223, 32767
    %v240 = vand.u32 %v224, 32767
    %v241 = vand.u32 %v225, 32767
    %v242 = vand.u32 %v226, 32767
    %v243 = vand.u32 %v227, 32767
    %v244 = vand.u32 %v228, 32767
    %v245 = vand.u32 %v229, 32767
    %v246 = vand.u32 %v230, 32767
    %v247 = vand.u32 %v231, 32767
    %v248 = vor.u32 %v200, %v232
    %v249 = vor.u32 %v201, %v233
    %v250 = vor.u32 %v202, %v234
    %v251 = vor.u32 %v203, %v235
    %v252 = vor.u32 %v204, %v236
    %v253 = vor.u32 %v205, %v237
    %v254 = vor.u32 %v206, %v238
    %v255 = vor.u32 %v207, %v239
    %v256 = vor.u32 %v208, %v240
    %v257 = vor.u32 %v209, %v241
    %v258 = vor.u32 %v210, %v242
    %v259 = vor.u32 %v211, %v243
    %v260 = vor.u32 %v212, %v244
    %v261 = vor.u32 %v213, %v245
    %v262 = vor.u32 %v214, %v246
    %v263 = vor.u32 %v215, %v247
    %v264 = vxor.u32 %v248, %v184
    %v265 = vxor.u32 %v249, %v185
    %v266 = vxor.u32 %v250, %v186
    %v267 = vxor.u32 %v251, %v187
    %v268 = vxor.u32 %v252, %v188
    %v269 = vxor.u32 %v253, %v189
    %v270 = vxor.u32 %v254, %v190
    %v271 = vxor.u32 %v255, %v191
    %v272 = vxor.u32 %v256, %v192
    %v273 = vxor.u32 %v257, %v193
    %v274 = vxor.u32 %v258, %v194
    %v275 = vxor.u32 %v259, %v195
    %v276 = vxor.u32 %v260, %v196
    %v277 = vxor.u32 %v261, %v197
    %v278 = vxor.u32 %v262, %v198
    %v279 = vxor.u32 %v263, %v199
    %v280 = vadd.s32 %v184, %v264
    %v281 = vadd.s32 %v185, %v265
    %v282 = vadd.s32 %v186, %v266
    %v283 = vadd.s32 %v187, %v267
    %v284 = vadd.s32 %v188, %v268
    %v285 = vadd.s32 %v189, %v269
    %v286 = vadd.s32 %v190, %v270
    %v287 = vadd.s32 %v191, %v271
    %v288 = vadd.s32 %v192, %v272
    %v289 = vadd.s32 %v193, %v273
    %v290 = vadd.s32 %v194, %v274
    %v291 = vadd.s32 %v195, %v275
    %v292 = vadd.s32 %v196, %v276
    %v293 = vadd.s32 %v197, %v277
    %v294 = vadd.s32 %v198, %v278
    %v295 = vadd.s32 %v199, %v279
    %v296 = vshll.u32 %v264, 26
    %v297 = vshll.u32 %v265, 26
    %v298 = vshll.u32 %v266, 26
    %v299 = vshll.u32 %v267, 26
    %v300 = vshll.u32 %v268, 26
    %v301 = vshll.u32 %v269, 26
    %v302 = vshll.u32 %v270, 26
    %v303 = vshll.u32 %v271, 26
    %v304 = vshll.u32 %v272, 26
    %v305 = vshll.u32 %v273, 26
    %v306 = vshll.u32 %v274, 26
    %v307 = vshll.u32 %v275, 26
    %v308 = vshll.u32 %v276, 26
    %v309 = vshll.u32 %v277, 26
    %v310 = vshll.u32 %v278, 26
    %v311 = vshll.u32 %v279, 26
    %v312 = vshra.s32 %v264, 6
    %v313 = vshra.s32 %v265, 6
    %v314 = vshra.s32 %v266, 6
    %v315 = vshra.s32 %v267, 6
    %v316 = vshra.s32 %v268, 6
    %v317 = vshra.s32 %v269, 6
    %v318 = vshra.s32 %v270, 6
    %v319 = vshra.s32 %v271, 6
    %v320 = vshra.s32 %v272, 6
    %v321 = vshra.s32 %v273, 6
    %v322 = vshra.s32 %v274, 6
    %v323 = vshra.s32 %v275, 6
    %v324 = vshra.s32 %v276, 6
    %v325 = vshra.s32 %v277, 6
    %v326 = vshra.s32 %v278, 6
    %v327 = vshra.s32 %v279, 6
    %v328 = vand.u32 %v312, 67108863
    %v329 = vand.u32 %v313, 67108863
    %v330 = vand.u32 %v314, 67108863
    %v331 = vand.u32 %v315, 67108863
    %v332 = vand.u32 %v316, 67108863
    %v333 = vand.u32 %v317, 67108863
    %v334 = vand.u32 %v318, 67108863
    %v335 = vand.u32 %v319, 67108863
    %v336 = vand.u32 %v320, 67108863
    %v337 = vand.u32 %v321, 67108863
    %v338 = vand.u32 %v322, 67108863
    %v339 = vand.u32 %v323, 67108863
    %v340 = vand.u32 %v324, 67108863
    %v341 = vand.u32 %v325, 67108863
    %v342 = vand.u32 %v326, 67108863
    %v343 = vand.u32 %v327, 67108863
    %v344 = vor.u32 %v296, %v328
    %v345 = vor.u32 %v297, %v329
    %v346 = vor.u32 %v298, %v330
    %v347 = vor.u32 %v299, %v331
    %v348 = vor.u32 %v300, %v332
    %v349 = vor.u32 %v301, %v333
    %v350 = vor.u32 %v302, %v334
    %v351 = vor.u32 %v303, %v335
    %v352 = vor.u32 %v304, %v336
    %v353 = vor.u32 %v305, %v337
    %v354 = vor.u32 %v306, %v338
    %v355 = vor.u32 %v307, %v339
    %v356 = vor.u32 %v308, %v340
    %v357 = vor.u32 %v309, %v341
    %v358 = vor.u32 %v310, %v342
    %v359 = vor.u32 %v311, %v343
    %v360 = vxor.u32 %v344, %v280
    %v361 = vxor.u32 %v345, %v281
    %v362 = vxor.u32 %v346, %v282
    %v363 = vxor.u32 %v347, %v283
    %v364 = vxor.u32 %v348, %v284
    %v365 = vxor.u32 %v349, %v285
    %v366 = vxor.u32 %v350, %v286
    %v367 = vxor.u32 %v351, %v287
    %v368 = vxor.u32 %v352, %v288
    %v369 = vxor.u32 %v353, %v289
    %v370 = vxor.u32 %v354, %v290
    %v371 = vxor.u32 %v355, %v291
    %v372 = vxor.u32 %v356, %v292
    %v373 = vxor.u32 %v357, %v293
    %v374 = vxor.u32 %v358, %v294
    %v375 = vxor.u32 %v359, %v295
    %v376 = vadd.s32 %v280, %v360
    %v377 = vadd.s32 %v281, %v361
    %v378 = vadd.s32 %v282, %v362
    %v379 = vadd.s32 %v283, %v363
    %v380 = vadd.s32 %v284, %v364
    %v381 = vadd.s32 %v285, %v365
    %v382 = vadd.s32 %v286, %v366
    %v383 = vadd.s32 %v287, %v367
    %v384 = vadd.s32 %v288, %v368
    %v385 = vadd.s32 %v289, %v369
    %v386 = vadd.s32 %v290, %v370
    %v387 = vadd.s32 %v291, %v371
    %v388 = vadd.s32 %v292, %v372
    %v389 = vadd.s32 %v293, %v373
    %v390 = vadd.s32 %v294, %v374
    %v391 = vadd.s32 %v295, %v375
    %v392 = vshll.u32 %v360, 6
    %v393 = vshll.u32 %v361, 6
    %v394 = vshll.u32 %v362, 6
    %v395 = vshll.u32 %v363, 6
    %v396 = vshll.u32 %v364, 6
    %v397 = vshll.u32 %v365, 6
    %v398 = vshll.u32 %v366, 6
    %v399 = vshll.u32 %v367, 6
    %v400 = vshll.u32 %v368, 6
    %v401 = vshll.u32 %v369, 6
    %v402 = vshll.u32 %v370, 6
    %v403 = vshll.u32 %v371, 6
    %v404 = vshll.u32 %v372, 6
    %v405 = vshll.u32 %v373, 6
    %v406 = vshll.u32 %v374, 6
    %v407 = vshll.u32 %v375, 6
    %v408 = vshra.s32 %v360, 26
    %v409 = vshra.s32 %v361, 26
    %v410 = vshra.s32 %v362, 26
    %v411 = vshra.s32 %v363, 26
    %v412 = vshra.s32 %v364, 26
    %v413 = vshra.s32 %v365, 26
    %v414 = vshra.s32 %v366, 26
    %v415 = vshra.s32 %v367, 26
    %v416 = vshra.s32 %v368, 26
    %v417 = vshra.s32 %v369, 26
    %v418 = vshra.s32 %v370, 26
    %v419 = vshra.s32 %v371, 26
    %v420 = vshra.s32 %v372, 26
    %v421 = vshra.s32 %v373, 26
    %v422 = vshra.s32 %v374, 26
    %v423 = vshra.s32 %v375, 26
    %v424 = vand.u32 %v408, 63
    %v425 = vand.u32 %v409, 63
    %v426 = vand.u32 %v410, 63
    %v427 = vand.u32 %v411, 63
    %v428 = vand.u32 %v412, 63
    %v429 = vand.u32 %v413, 63
    %v430 = vand.u32 %v414, 63
    %v431 = vand.u32 %v415, 63
    %v432 = vand.u32 %v416, 63
    %v433 = vand.u32 %v417, 63
    %v434 = vand.u32 %v418, 63
    %v435 = vand.u32 %v419, 63
    %v436 = vand.u32 %v420, 63
    %v437 = vand.u32 %v421, 63
    %v438 = vand.u32 %v422, 63
    %v439 = vand.u32 %v423, 63
    %v440 = vor.u32 %v392, %v424
    %v441 = vor.u32 %v393, %v425
    %v442 = vor.u32 %v394, %v426
    %v443 = vor.u32 %v395, %v427
    %v444 = vor.u32 %v396, %v428
    %v445 = vor.u32 %v397, %v429
    %v446 = vor.u32 %v398, %v430
    %v447 = vor.u32 %v399, %v431
    %v448 = vor.u32 %v400, %v432
    %v449 = vor.u32 %v401, %v433
    %v450 = vor.u32 %v402, %v434
    %v451 = vor.u32 %v403, %v435
    %v452 = vor.u32 %v404, %v436
    %v453 = vor.u32 %v405, %v437
    %v454 = vor.u32 %v406, %v438
    %v455 = vor.u32 %v407, %v439
    %v456 = vxor.u32 %v440, %v376
    %v457 = vxor.u32 %v441, %v377
    %v458 = vxor.u32 %v442, %v378
    %v459 = vxor.u32 %v443, %v379
    %v460 = vxor.u32 %v444, %v380
    %v461 = vxor.u32 %v445, %v381
    %v462 = vxor.u32 %v446, %v382
    %v463 = vxor.u32 %v447, %v383
    %v464 = vxor.u32 %v448, %v384
    %v465 = vxor.u32 %v449, %v385
    %v466 = vxor.u32 %v450, %v386
    %v467 = vxor.u32 %v451, %v387
    %v468 = vxor.u32 %v452, %v388
    %v469 = vxor.u32 %v453, %v389
    %v470 = vxor.u32 %v454, %v390
    %v471 = vxor.u32 %v455, %v391
    %v472 = vadd.s32 %v376, %v50
    %v473 = vadd.s32 %v377, %v50
    %v474 = vadd.s32 %v378, %v50
    %v475 = vadd.s32 %v379, %v50
    %v476 = vadd.s32 %v380, %v50
    %v477 = vadd.s32 %v381, %v50
    %v478 = vadd.s32 %v382, %v50
    %v479 = vadd.s32 %v383, %v50
    %v480 = vadd.s32 %v384, %v50
    %v481 = vadd.s32 %v385, %v50
    %v482 = vadd.s32 %v386, %v50
    %v483 = vadd.s32 %v387, %v50
    %v484 = vadd.s32 %v388, %v50
    %v485 = vadd.s32 %v389, %v50
    %v486 = vadd.s32 %v390, %v50
    %v487 = vadd.s32 %v391, %v50
    %v488 = vadd.s32 %v456, %v76
    %v489 = vadd.s32 %v457, %v76
    %v490 = vadd.s32 %v458, %v76
    %v491 = vadd.s32 %v459, %v76
    %v492 = vadd.s32 %v460, %v76
    %v493 = vadd.s32 %v461, %v76
    %v494 = vadd.s32 %v462, %v76
    %v495 = vadd.s32 %v463, %v76
    %v496 = vadd.s32 %v464, %v76
    %v497 = vadd.s32 %v465, %v76
    %v498 = vadd.s32 %v466, %v76
    %v499 = vadd.s32 %v467, %v76
    %v500 = vadd.s32 %v468, %v76
    %v501 = vadd.s32 %v469, %v76
    %v502 = vadd.s32 %v470, %v76
    %v503 = vadd.s32 %v471, %v76
    %v504 = vadd.s32 %v488, 1
    %v505 = vadd.s32 %v489, 1
    %v506 = vadd.s32 %v490, 1
    %v507 = vadd.s32 %v491, 1
    %v508 = vadd.s32 %v492, 1
    %v509 = vadd.s32 %v493, 1
    %v510 = vadd.s32 %v494, 1
    %v511 = vadd.s32 %v495, 1
    %v512 = vadd.s32 %v496, 1
    %v513 = vadd.s32 %v497, 1
    %v514 = vadd.s32 %v498, 1
    %v515 = vadd.s32 %v499, 1
    %v516 = vadd.s32 %v500, 1
    %v517 = vadd.s32 %v501, 1
    %v518 = vadd.s32 %v502, 1
    %v519 = vadd.s32 %v503, 1
    %v520 = vadd.s32 %v472, %v504
    %v521 = vadd.s32 %v473, %v505
    %v522 = vadd.s32 %v474, %v506
    %v523 = vadd.s32 %v475, %v507
    %v524 = vadd.s32 %v476, %v508
    %v525 = vadd.s32 %v477, %v509
    %v526 = vadd.s32 %v478, %v510
    %v527 = vadd.s32 %v479, %v511
    %v528 = vadd.s32 %v480, %v512
    %v529 = vadd.s32 %v481, %v513
    %v530 = vadd.s32 %v482, %v514
    %v531 = vadd.s32 %v483, %v515
    %v532 = vadd.s32 %v484, %v516
    %v533 = vadd.s32 %v485, %v517
    %v534 = vadd.s32 %v486, %v518
    %v535 = vadd.s32 %v487, %v519
    %v536 = vshll.u32 %v504, 17
    %v537 = vshll.u32 %v505, 17
    %v538 = vshll.u32 %v506, 17
    %v539 = vshll.u32 %v507, 17
    %v540 = vshll.u32 %v508, 17
    %v541 = vshll.u32 %v509, 17
    %v542 = vshll.u32 %v510, 17
    %v543 = vshll.u32 %v511, 17
    %v544 = vshll.u32 %v512, 17
    %v545 = vshll.u32 %v513, 17
    %v546 = vshll.u32 %v514, 17
    %v547 = vshll.u32 %v515, 17
    %v548 = vshll.u32 %v516, 17
    %v549 = vshll.u32 %v517, 17
    %v550 = vshll.u32 %v518, 17
    %v551 = vshll.u32 %v519, 17
    %v552 = vshra.s32 %v504, 15
    %v553 = vshra.s32 %v505, 15
    %v554 = vshra.s32 %v506, 15
    %v555 = vshra.s32 %v507, 15
    %v556 = vshra.s32 %v508, 15
    %v557 = vshra.s32 %v509, 15
    %v558 = vshra.s32 %v510, 15
    %v559 = vshra.s32 %v511, 15
    %v560 = vshra.s32 %v512, 15
    %v561 = vshra.s32 %v513, 15
    %v562 = vshra.s32 %v514, 15
    %v563 = vshra.s32 %v515, 15
    %v564 = vshra.s32 %v516, 15
    %v565 = vshra.s32 %v517, 15
    %v566 = vshra.s32 %v518, 15
    %v567 = vshra.s32 %v519, 15
    %v568 = vand.u32 %v552, 131071
    %v569 = vand.u32 %v553, 131071
    %v570 = vand.u32 %v554, 131071
    %v571 = vand.u32 %v555, 131071
    %v572 = vand.u32 %v556, 131071
    %v573 = vand.u32 %v557, 131071
    %v574 = vand.u32 %v558, 131071
    %v575 = vand.u32 %v559, 131071
    %v576 = vand.u32 %v560, 131071
    %v577 = vand.u32 %v561, 131071
    %v578 = vand.u32 %v562, 131071
    %v579 = vand.u32 %v563, 131071
    %v580 = vand.u32 %v564, 131071
    %v581 = vand.u32 %v565, 131071
    %v582 = vand.u32 %v566, 131071
    %v583 = vand.u32 %v567, 131071
    %v584 = vor.u32 %v536, %v568
    %v585 = vor.u32 %v537, %v569
    %v586 = vor.u32 %v538, %v570
    %v587 = vor.u32 %v539, %v571
    %v588 = vor.u32 %v540, %v572
    %v589 = vor.u32 %v541, %v573
    %v590 = vor.u32 %v542, %v574
    %v591 = vor.u32 %v543, %v575
    %v592 = vor.u32 %v544, %v576
    %v593 = vor.u32 %v545, %v577
    %v594 = vor.u32 %v546, %v578
    %v595 = vor.u32 %v547, %v579
    %v596 = vor.u32 %v548, %v580
    %v597 = vor.u32 %v549, %v581
    %v598 = vor.u32 %v550, %v582
    %v599 = vor.u32 %v551, %v583
    %v600 = vxor.u32 %v584, %v520
    %v601 = vxor.u32 %v585, %v521
    %v602 = vxor.u32 %v586, %v522
    %v603 = vxor.u32 %v587, %v523
    %v604 = vxor.u32 %v588, %v524
    %v605 = vxor.u32 %v589, %v525
    %v606 = vxor.u32 %v590, %v526
    %v607 = vxor.u32 %v591, %v527
    %v608 = vxor.u32 %v592, %v528
    %v609 = vxor.u32 %v593, %v529
    %v610 = vxor.u32 %v594, %v530
    %v611 = vxor.u32 %v595, %v531
    %v612 = vxor.u32 %v596, %v532
    %v613 = vxor.u32 %v597, %v533
    %v614 = vxor.u32 %v598, %v534
    %v615 = vxor.u32 %v599, %v535
    %v616 = vadd.s32 %v520, %v600
    %v617 = vadd.s32 %v521, %v601
    %v618 = vadd.s32 %v522, %v602
    %v619 = vadd.s32 %v523, %v603
    %v620 = vadd.s32 %v524, %v604
    %v621 = vadd.s32 %v525, %v605
    %v622 = vadd.s32 %v526, %v606
    %v623 = vadd.s32 %v527, %v607
    %v624 = vadd.s32 %v528, %v608
    %v625 = vadd.s32 %v529, %v609
    %v626 = vadd.s32 %v530, %v610
    %v627 = vadd.s32 %v531, %v611
    %v628 = vadd.s32 %v532, %v612
    %v629 = vadd.s32 %v533, %v613
    %v630 = vadd.s32 %v534, %v614
    %v631 = vadd.s32 %v535, %v615
    %v632 = vshll.u32 %v600, 29
    %v633 = vshll.u32 %v601, 29
    %v634 = vshll.u32 %v602, 29
    %v635 = vshll.u32 %v603, 29
    %v636 = vshll.u32 %v604, 29
    %v637 = vshll.u32 %v605, 29
    %v638 = vshll.u32 %v606, 29
    %v639 = vshll.u32 %v607, 29
    %v640 = vshll.u32 %v608, 29
    %v641 = vshll.u32 %v609, 29
    %v642 = vshll.u32 %v610, 29
    %v643 = vshll.u32 %v611, 29
    %v644 = vshll.u32 %v612, 29
    %v645 = vshll.u32 %v613, 29
    %v646 = vshll.u32 %v614, 29
    %v647 = vshll.u32 %v615, 29
    %v648 = vshra.s32 %v600, 3
    %v649 = vshra.s32 %v601, 3
    %v650 = vshra.s32 %v602, 3
    %v651 = vshra.s32 %v603, 3
    %v652 = vshra.s32 %v604, 3
    %v653 = vshra.s32 %v605, 3
    %v654 = vshra.s32 %v606, 3
    %v655 = vshra.s32 %v607, 3
    %v656 = vshra.s32 %v608, 3
    %v657 = vshra.s32 %v609, 3
    %v658 = vshra.s32 %v610, 3
    %v659 = vshra.s32 %v611, 3
    %v660 = vshra.s32 %v612, 3
    %v661 = vshra.s32 %v613, 3
    %v662 = vshra.s32 %v614, 3
    %v663 = vshra.s32 %v615, 3
    %v664 = vand.u32 %v648, 536870911
    %v665 = vand.u32 %v649, 536870911
    %v666 = vand.u32 %v650, 536870911
    %v667 = vand.u32 %v651, 536870911
    %v668 = vand.u32 %v652, 536870911
    %v669 = vand.u32 %v653, 536870911
    %v670 = vand.u32 %v654, 536870911
    %v671 = vand.u32 %v655, 536870911
    %v672 = vand.u32 %v656, 536870911
    %v673 = vand.u32 %v657, 536870911
    %v674 = vand.u32 %v658, 536870911
    %v675 = vand.u32 %v659, 536870911
    %v676 = vand.u32 %v660, 536870911
    %v677 = vand.u32 %v661, 536870911
    %v678 = vand.u32 %v662, 536870911
    %v679 = vand.u32 %v663, 536870911
    %v680 = vor.u32 %v632, %v664
    %v681 = vor.u32 %v633, %v665
    %v682 = vor.u32 %v634, %v666
    %v683 = vor.u32 %v635, %v667
    %v684 = vor.u32 %v636, %v668
    %v685 = vor.u32 %v637, %v669
    %v686 = vor.u32 %v638, %v670
    %v687 = vor.u32 %v639, %v671
    %v688 = vor.u32 %v640, %v672
    %v689 = vor.u32 %v641, %v673
    %v690 = vor.u32 %v642, %v674
    %v691 = vor.u32 %v643, %v675
    %v692 = vor.u32 %v644, %v676
    %v693 = vor.u32 %v645, %v677
    %v694 = vor.u32 %v646, %v678
    %v695 = vor.u32 %v647, %v679
    %v696 = vxor.u32 %v680, %v616
    %v697 = vxor.u32 %v681, %v617
    %v698 = vxor.u32 %v682, %v618
    %v699 = vxor.u32 %v683, %v619
    %v700 = vxor.u32 %v684, %v620
    %v701 = vxor.u32 %v685, %v621
    %v702 = vxor.u32 %v686, %v622
    %v703 = vxor.u32 %v687, %v623
    %v704 = vxor.u32 %v688, %v624
    %v705 = vxor.u32 %v689, %v625
    %v706 = vxor.u32 %v690, %v626
    %v707 = vxor.u32 %v691, %v627
    %v708 = vxor.u32 %v692, %v628
    %v709 = vxor.u32 %v693, %v629
    %v710 = vxor.u32 %v694, %v630
    %v711 = vxor.u32 %v695, %v631
    %v712 = vadd.s32 %v616, %v696
    %v713 = vadd.s32 %v617, %v697
    %v714 = vadd.s32 %v618, %v698
    %v715 = vadd.s32 %v619, %v699
    %v716 = vadd.s32 %v620, %v700
    %v717 = vadd.s32 %v621, %v701
    %v718 = vadd.s32 %v622, %v702
    %v719 = vadd.s32 %v623, %v703
    %v720 = vadd.s32 %v624, %v704
    %v721 = vadd.s32 %v625, %v705
    %v722 = vadd.s32 %v626, %v706
    %v723 = vadd.s32 %v627, %v707
    %v724 = vadd.s32 %v628, %v708
    %v725 = vadd.s32 %v629, %v709
    %v726 = vadd.s32 %v630, %v710
    %v727 = vadd.s32 %v631, %v711
    %v728 = vshll.u32 %v696, 16
    %v729 = vshll.u32 %v697, 16
    %v730 = vshll.u32 %v698, 16
    %v731 = vshll.u32 %v699, 16
    %v732 = vshll.u32 %v700, 16
    %v733 = vshll.u32 %v701, 16
    %v734 = vshll.u32 %v702, 16
    %v735 = vshll.u32 %v703, 16
    %v736 = vshll.u32 %v704, 16
    %v737 = vshll.u32 %v705, 16
    %v738 = vshll.u32 %v706, 16
    %v739 = vshll.u32 %v707, 16
    %v740 = vshll.u32 %v708, 16
    %v741 = vshll.u32 %v709, 16
    %v742 = vshll.u32 %v710, 16
    %v743 = vshll.u32 %v711, 16
    %v744 = vshra.s32 %v696, 16
    %v745 = vshra.s32 %v697, 16
    %v746 = vshra.s32 %v698, 16
    %v747 = vshra.s32 %v699, 16
    %v748 = vshra.s32 %v700, 16
    %v749 = vshra.s32 %v701, 16
    %v750 = vshra.s32 %v702, 16
    %v751 = vshra.s32 %v703, 16
    %v752 = vshra.s32 %v704, 16
    %v753 = vshra.s32 %v705, 16
    %v754 = vshra.s32 %v706, 16
    %v755 = vshra.s32 %v707, 16
    %v756 = vshra.s32 %v708, 16
    %v757 = vshra.s32 %v709, 16
    %v758 = vshra.s32 %v710, 16
    %v759 = vshra.s32 %v711, 16
    %v760 = vand.u32 %v744, 65535
    %v761 = vand.u32 %v745, 65535
    %v762 = vand.u32 %v746, 65535
    %v763 = vand.u32 %v747, 65535
    %v764 = vand.u32 %v748, 65535
    %v765 = vand.u32 %v749, 65535
    %v766 = vand.u32 %v750, 65535
    %v767 = vand.u32 %v751, 65535
    %v768 = vand.u32 %v752, 65535
    %v769 = vand.u32 %v753, 65535
    %v770 = vand.u32 %v754, 65535
    %v771 = vand.u32 %v755, 65535
    %v772 = vand.u32 %v756, 65535
    %v773 = vand.u32 %v757, 65535
    %v774 = vand.u32 %v758, 65535
    %v775 = vand.u32 %v759, 65535
    %v776 = vor.u32 %v728, %v760
    %v777 = vor.u32 %v729, %v761
    %v778 = vor.u32 %v730, %v762
    %v779 = vor.u32 %v731, %v763
    %v780 = vor.u32 %v732, %v764
    %v781 = vor.u32 %v733, %v765
    %v782 = vor.u32 %v734, %v766
    %v783 = vor.u32 %v735, %v767
    %v784 = vor.u32 %v736, %v768
    %v785 = vor.u32 %v737, %v769
    %v786 = vor.u32 %v738, %v770
    %v787 = vor.u32 %v739, %v771
    %v788 = vor.u32 %v740, %v772
    %v789 = vor.u32 %v741, %v773
    %v790 = vor.u32 %v742, %v774
    %v791 = vor.u32 %v743, %v775
    %v792 = vxor.u32 %v776, %v712
    %v793 = vxor.u32 %v777, %v713
    %v794 = vxor.u32 %v778, %v714
    %v795 = vxor.u32 %v779, %v715
    %v796 = vxor.u32 %v780, %v716
    %v797 = vxor.u32 %v781, %v717
    %v798 = vxor.u32 %v782, %v718
    %v799 = vxor.u32 %v783, %v719
    %v800 = vxor.u32 %v784, %v720
    %v801 = vxor.u32 %v785, %v721
    %v802 = vxor.u32 %v786, %v722
    %v803 = vxor.u32 %v787, %v723
    %v804 = vxor.u32 %v788, %v724
    %v805 = vxor.u32 %v789, %v725
    %v806 = vxor.u32 %v790, %v726
    %v807 = vxor.u32 %v791, %v727
    %v808 = vadd.s32 %v712, %v792
    %v809 = vadd.s32 %v713, %v793
    %v810 = vadd.s32 %v714, %v794
    %v811 = vadd.s32 %v715, %v795
    %v812 = vadd.s32 %v716, %v796
    %v813 = vadd.s32 %v717, %v797
    %v814 = vadd.s32 %v718, %v798
    %v815 = vadd.s32 %v719, %v799
    %v816 = vadd.s32 %v720, %v800
    %v817 = vadd.s32 %v721, %v801
    %v818 = vadd.s32 %v722, %v802
    %v819 = vadd.s32 %v723, %v803
    %v820 = vadd.s32 %v724, %v804
    %v821 = vadd.s32 %v725, %v805
    %v822 = vadd.s32 %v726, %v806
    %v823 = vadd.s32 %v727, %v807
    %v824 = vshll.u32 %v792, 24
    %v825 = vshll.u32 %v793, 24
    %v826 = vshll.u32 %v794, 24
    %v827 = vshll.u32 %v795, 24
    %v828 = vshll.u32 %v796, 24
    %v829 = vshll.u32 %v797, 24
    %v830 = vshll.u32 %v798, 24
    %v831 = vshll.u32 %v799, 24
    %v832 = vshll.u32 %v800, 24
    %v833 = vshll.u32 %v801, 24
    %v834 = vshll.u32 %v802, 24
    %v835 = vshll.u32 %v803, 24
    %v836 = vshll.u32 %v804, 24
    %v837 = vshll.u32 %v805, 24
    %v838 = vshll.u32 %v806, 24
    %v839 = vshll.u32 %v807, 24
    %v840 = vshra.s32 %v792, 8
    %v841 = vshra.s32 %v793, 8
    %v842 = vshra.s32 %v794, 8
    %v843 = vshra.s32 %v795, 8
    %v844 = vshra.s32 %v796, 8
    %v845 = vshra.s32 %v797, 8
    %v846 = vshra.s32 %v798, 8
    %v847 = vshra.s32 %v799, 8
    %v848 = vshra.s32 %v800, 8
    %v849 = vshra.s32 %v801, 8
    %v850 = vshra.s32 %v802, 8
    %v851 = vshra.s32 %v803, 8
    %v852 = vshra.s32 %v804, 8
    %v853 = vshra.s32 %v805, 8
    %v854 = vshra.s32 %v806, 8
    %v855 = vshra.s32 %v807, 8
    %v856 = vand.u32 %v840, 16777215
    %v857 = vand.u32 %v841, 16777215
    %v858 = vand.u32 %v842, 16777215
    %v859 = vand.u32 %v843, 16777215
    %v860 = vand.u32 %v844, 16777215
    %v861 = vand.u32 %v845, 16777215
    %v862 = vand.u32 %v846, 16777215
    %v863 = vand.u32 %v847, 16777215
    %v864 = vand.u32 %v848, 16777215
    %v865 = vand.u32 %v849, 16777215
    %v866 = vand.u32 %v850, 16777215
    %v867 = vand.u32 %v851, 16777215
    %v868 = vand.u32 %v852, 16777215
    %v869 = vand.u32 %v853, 16777215
    %v870 = vand.u32 %v854, 16777215
    %v871 = vand.u32 %v855, 16777215
    %v872 = vor.u32 %v824, %v856
    %v873 = vor.u32 %v825, %v857
    %v874 = vor.u32 %v826, %v858
    %v875 = vor.u32 %v827, %v859
    %v876 = vor.u32 %v828, %v860
    %v877 = vor.u32 %v829, %v861
    %v878 = vor.u32 %v830, %v862
    %v879 = vor.u32 %v831, %v863
    %v880 = vor.u32 %v832, %v864
    %v881 = vor.u32 %v833, %v865
    %v882 = vor.u32 %v834, %v866
    %v883 = vor.u32 %v835, %v867
    %v884 = vor.u32 %v836, %v868
    %v885 = vor.u32 %v837, %v869
    %v886 = vor.u32 %v838, %v870
    %v887 = vor.u32 %v839, %v871
    %v888 = vxor.u32 %v872, %v808
    %v889 = vxor.u32 %v873, %v809
    %v890 = vxor.u32 %v874, %v810
    %v891 = vxor.u32 %v875, %v811
    %v892 = vxor.u32 %v876, %v812
    %v893 = vxor.u32 %v877, %v813
    %v894 = vxor.u32 %v878, %v814
    %v895 = vxor.u32 %v879, %v815
    %v896 = vxor.u32 %v880, %v816
    %v897 = vxor.u32 %v881, %v817
    %v898 = vxor.u32 %v882, %v818
    %v899 = vxor.u32 %v883, %v819
    %v900 = vxor.u32 %v884, %v820
    %v901 = vxor.u32 %v885, %v821
    %v902 = vxor.u32 %v886, %v822
    %v903 = vxor.u32 %v887, %v823
    %v904 = vadd.s32 %v808, %v76
    %v905 = vadd.s32 %v809, %v76
    %v906 = vadd.s32 %v810, %v76
    %v907 = vadd.s32 %v811, %v76
    %v908 = vadd.s32 %v812, %v76
    %v909 = vadd.s32 %v813, %v76
    %v910 = vadd.s32 %v814, %v76
    %v911 = vadd.s32 %v815, %v76
    %v912 = vadd.s32 %v816, %v76
    %v913 = vadd.s32 %v817, %v76
    %v914 = vadd.s32 %v818, %v76
    %v915 = vadd.s32 %v819, %v76
    %v916 = vadd.s32 %v820, %v76
    %v917 = vadd.s32 %v821, %v76
    %v918 = vadd.s32 %v822, %v76
    %v919 = vadd.s32 %v823, %v76
    %v920 = vadd.s32 %v888, %v48
    %v921 = vadd.s32 %v889, %v48
    %v922 = vadd.s32 %v890, %v48
    %v923 = vadd.s32 %v891, %v48
    %v924 = vadd.s32 %v892, %v48
    %v925 = vadd.s32 %v893, %v48
    %v926 = vadd.s32 %v894, %v48
    %v927 = vadd.s32 %v895, %v48
    %v928 = vadd.s32 %v896, %v48
    %v929 = vadd.s32 %v897, %v48
    %v930 = vadd.s32 %v898, %v48
    %v931 = vadd.s32 %v899, %v48
    %v932 = vadd.s32 %v900, %v48
    %v933 = vadd.s32 %v901, %v48
    %v934 = vadd.s32 %v902, %v48
    %v935 = vadd.s32 %v903, %v48
    %v936 = vadd.s32 %v920, 2
    %v937 = vadd.s32 %v921, 2
    %v938 = vadd.s32 %v922, 2
    %v939 = vadd.s32 %v923, 2
    %v940 = vadd.s32 %v924, 2
    %v941 = vadd.s32 %v925, 2
    %v942 = vadd.s32 %v926, 2
    %v943 = vadd.s32 %v927, 2
    %v944 = vadd.s32 %v928, 2
    %v945 = vadd.s32 %v929, 2
    %v946 = vadd.s32 %v930, 2
    %v947 = vadd.s32 %v931, 2
    %v948 = vadd.s32 %v932, 2
    %v949 = vadd.s32 %v933, 2
    %v950 = vadd.s32 %v934, 2
    %v951 = vadd.s32 %v935, 2
    %v952 = vadd.s32 %v904, %v936
    %v953 = vadd.s32 %v905, %v937
    %v954 = vadd.s32 %v906, %v938
    %v955 = vadd.s32 %v907, %v939
    %v956 = vadd.s32 %v908, %v940
    %v957 = vadd.s32 %v909, %v941
    %v958 = vadd.s32 %v910, %v942
    %v959 = vadd.s32 %v911, %v943
    %v960 = vadd.s32 %v912, %v944
    %v961 = vadd.s32 %v913, %v945
    %v962 = vadd.s32 %v914, %v946
    %v963 = vadd.s32 %v915, %v947
    %v964 = vadd.s32 %v916, %v948
    %v965 = vadd.s32 %v917, %v949
    %v966 = vadd.s32 %v918, %v950
    %v967 = vadd.s32 %v919, %v951
    %v968 = vshll.u32 %v936, 13
    %v969 = vshll.u32 %v937, 13
    %v970 = vshll.u32 %v938, 13
    %v971 = vshll.u32 %v939, 13
    %v972 = vshll.u32 %v940, 13
    %v973 = vshll.u32 %v941, 13
    %v974 = vshll.u32 %v942, 13
    %v975 = vshll.u32 %v943, 13
    %v976 = vshll.u32 %v944, 13
    %v977 = vshll.u32 %v945, 13
    %v978 = vshll.u32 %v946, 13
    %v979 = vshll.u32 %v947, 13
    %v980 = vshll.u32 %v948, 13
    %v981 = vshll.u32 %v949, 13
    %v982 = vshll.u32 %v950, 13
    %v983 = vshll.u32 %v951, 13
    %v984 = vshra.s32 %v936, 19
    %v985 = vshra.s32 %v937, 19
    %v986 = vshra.s32 %v938, 19
    %v987 = vshra.s32 %v939, 19
    %v988 = vshra.s32 %v940, 19
    %v989 = vshra.s32 %v941, 19
    %v990 = vshra.s32 %v942, 19
    %v991 = vshra.s32 %v943, 19
    %v992 = vshra.s32 %v944, 19
    %v993 = vshra.s32 %v945, 19
    %v994 = vshra.s32 %v946, 19
    %v995 = vshra.s32 %v947, 19
    %v996 = vshra.s32 %v948, 19
    %v997 = vshra.s32 %v949, 19
    %v998 = vshra.s32 %v950, 19
    %v999 = vshra.s32 %v951, 19
    %v1000 = vand.u32 %v984, 8191
    %v1001 = vand.u32 %v985, 8191
    %v1002 = vand.u32 %v986, 8191
    %v1003 = vand.u32 %v987, 8191
    %v1004 = vand.u32 %v988, 8191
    %v1005 = vand.u32 %v989, 8191
    %v1006 = vand.u32 %v990, 8191
    %v1007 = vand.u32 %v991, 8191
    %v1008 = vand.u32 %v992, 8191
    %v1009 = vand.u32 %v993, 8191
    %v1010 = vand.u32 %v994, 8191
    %v1011 = vand.u32 %v995, 8191
    %v1012 = vand.u32 %v996, 8191
    %v1013 = vand.u32 %v997, 8191
    %v1014 = vand.u32 %v998, 8191
    %v1015 = vand.u32 %v999, 8191
    %v1016 = vor.u32 %v968, %v1000
    %v1017 = vor.u32 %v969, %v1001
    %v1018 = vor.u32 %v970, %v1002
    %v1019 = vor.u32 %v971, %v1003
    %v1020 = vor.u32 %v972, %v1004
    %v1021 = vor.u32 %v973, %v1005
    %v1022 = vor.u32 %v974, %v1006
    %v1023 = vor.u32 %v975, %v1007
    %v1024 = vor.u32 %v976, %v1008
    %v1025 = vor.u32 %v977, %v1009
    %v1026 = vor.u32 %v978, %v1010
    %v1027 = vor.u32 %v979, %v1011
    %v1028 = vor.u32 %v980, %v1012
    %v1029 = vor.u32 %v981, %v1013
    %v1030 = vor.u32 %v982, %v1014
    %v1031 = vor.u32 %v983, %v1015
    %v1032 = vxor.u32 %v1016, %v952
    %v1033 = vxor.u32 %v1017, %v953
    %v1034 = vxor.u32 %v1018, %v954
    %v1035 = vxor.u32 %v1019, %v955
    %v1036 = vxor.u32 %v1020, %v956
    %v1037 = vxor.u32 %v1021, %v957
    %v1038 = vxor.u32 %v1022, %v958
    %v1039 = vxor.u32 %v1023, %v959
    %v1040 = vxor.u32 %v1024, %v960
    %v1041 = vxor.u32 %v1025, %v961
    %v1042 = vxor.u32 %v1026, %v962
    %v1043 = vxor.u32 %v1027, %v963
    %v1044 = vxor.u32 %v1028, %v964
    %v1045 = vxor.u32 %v1029, %v965
    %v1046 = vxor.u32 %v1030, %v966
    %v1047 = vxor.u32 %v1031, %v967
    %v1048 = vadd.s32 %v952, %v1032
    %v1049 = vadd.s32 %v953, %v1033
    %v1050 = vadd.s32 %v954, %v1034
    %v1051 = vadd.s32 %v955, %v1035
    %v1052 = vadd.s32 %v956, %v1036
    %v1053 = vadd.s32 %v957, %v1037
    %v1054 = vadd.s32 %v958, %v1038
    %v1055 = vadd.s32 %v959, %v1039
    %v1056 = vadd.s32 %v960, %v1040
    %v1057 = vadd.s32 %v961, %v1041
    %v1058 = vadd.s32 %v962, %v1042
    %v1059 = vadd.s32 %v963, %v1043
    %v1060 = vadd.s32 %v964, %v1044
    %v1061 = vadd.s32 %v965, %v1045
    %v1062 = vadd.s32 %v966, %v1046
    %v1063 = vadd.s32 %v967, %v1047
    %v1064 = vshll.u32 %v1032, 15
    %v1065 = vshll.u32 %v1033, 15
    %v1066 = vshll.u32 %v1034, 15
    %v1067 = vshll.u32 %v1035, 15
    %v1068 = vshll.u32 %v1036, 15
    %v1069 = vshll.u32 %v1037, 15
    %v1070 = vshll.u32 %v1038, 15
    %v1071 = vshll.u32 %v1039, 15
    %v1072 = vshll.u32 %v1040, 15
    %v1073 = vshll.u32 %v1041, 15
    %v1074 = vshll.u32 %v1042, 15
    %v1075 = vshll.u32 %v1043, 15
    %v1076 = vshll.u32 %v1044, 15
    %v1077 = vshll.u32 %v1045, 15
    %v1078 = vshll.u32 %v1046, 15
    %v1079 = vshll.u32 %v1047, 15
    %v1080 = vshra.s32 %v1032, 17
    %v1081 = vshra.s32 %v1033, 17
    %v1082 = vshra.s32 %v1034, 17
    %v1083 = vshra.s32 %v1035, 17
    %v1084 = vshra.s32 %v1036, 17
    %v1085 = vshra.s32 %v1037, 17
    %v1086 = vshra.s32 %v1038, 17
    %v1087 = vshra.s32 %v1039, 17
    %v1088 = vshra.s32 %v1040, 17
    %v1089 = vshra.s32 %v1041, 17
    %v1090 = vshra.s32 %v1042, 17
    %v1091 = vshra.s32 %v1043, 17
    %v1092 = vshra.s32 %v1044, 17
    %v1093 = vshra.s32 %v1045, 17
    %v1094 = vshra.s32 %v1046, 17
    %v1095 = vshra.s32 %v1047, 17
    %v1096 = vand.u32 %v1080, 32767
    %v1097 = vand.u32 %v1081, 32767
    %v1098 = vand.u32 %v1082, 32767
    %v1099 = vand.u32 %v1083, 32767
    %v1100 = vand.u32 %v1084, 32767
    %v1101 = vand.u32 %v1085, 32767
    %v1102 = vand.u32 %v1086, 32767
    %v1103 = vand.u32 %v1087, 32767
    %v1104 = vand.u32 %v1088, 32767
    %v1105 = vand.u32 %v1089, 32767
    %v1106 = vand.u32 %v1090, 32767
    %v1107 = vand.u32 %v1091, 32767
    %v1108 = vand.u32 %v1092, 32767
    %v1109 = vand.u32 %v1093, 32767
    %v1110 = vand.u32 %v1094, 32767
    %v1111 = vand.u32 %v1095, 32767
    %v1112 = vor.u32 %v1064, %v1096
    %v1113 = vor.u32 %v1065, %v1097
    %v1114 = vor.u32 %v1066, %v1098
    %v1115 = vor.u32 %v1067, %v1099
    %v1116 = vor.u32 %v1068, %v1100
    %v1117 = vor.u32 %v1069, %v1101
    %v1118 = vor.u32 %v1070, %v1102
    %v1119 = vor.u32 %v1071, %v1103
    %v1120 = vor.u32 %v1072, %v1104
    %v1121 = vor.u32 %v1073, %v1105
    %v1122 = vor.u32 %v1074, %v1106
    %v1123 = vor.u32 %v1075, %v1107
    %v1124 = vor.u32 %v1076, %v1108
    %v1125 = vor.u32 %v1077, %v1109
    %v1126 = vor.u32 %v1078, %v1110
    %v1127 = vor.u32 %v1079, %v1111
    %v1128 = vxor.u32 %v1112, %v1048
    %v1129 = vxor.u32 %v1113, %v1049
    %v1130 = vxor.u32 %v1114, %v1050
    %v1131 = vxor.u32 %v1115, %v1051
    %v1132 = vxor.u32 %v1116, %v1052
    %v1133 = vxor.u32 %v1117, %v1053
    %v1134 = vxor.u32 %v1118, %v1054
    %v1135 = vxor.u32 %v1119, %v1055
    %v1136 = vxor.u32 %v1120, %v1056
    %v1137 = vxor.u32 %v1121, %v1057
    %v1138 = vxor.u32 %v1122, %v1058
    %v1139 = vxor.u32 %v1123, %v1059
    %v1140 = vxor.u32 %v1124, %v1060
    %v1141 = vxor.u32 %v1125, %v1061
    %v1142 = vxor.u32 %v1126, %v1062
    %v1143 = vxor.u32 %v1127, %v1063
    %v1144 = vadd.s32 %v1048, %v1128
    %v1145 = vadd.s32 %v1049, %v1129
    %v1146 = vadd.s32 %v1050, %v1130
    %v1147 = vadd.s32 %v1051, %v1131
    %v1148 = vadd.s32 %v1052, %v1132
    %v1149 = vadd.s32 %v1053, %v1133
    %v1150 = vadd.s32 %v1054, %v1134
    %v1151 = vadd.s32 %v1055, %v1135
    %v1152 = vadd.s32 %v1056, %v1136
    %v1153 = vadd.s32 %v1057, %v1137
    %v1154 = vadd.s32 %v1058, %v1138
    %v1155 = vadd.s32 %v1059, %v1139
    %v1156 = vadd.s32 %v1060, %v1140
    %v1157 = vadd.s32 %v1061, %v1141
    %v1158 = vadd.s32 %v1062, %v1142
    %v1159 = vadd.s32 %v1063, %v1143
    %v1160 = vshll.u32 %v1128, 26
    %v1161 = vshll.u32 %v1129, 26
    %v1162 = vshll.u32 %v1130, 26
    %v1163 = vshll.u32 %v1131, 26
    %v1164 = vshll.u32 %v1132, 26
    %v1165 = vshll.u32 %v1133, 26
    %v1166 = vshll.u32 %v1134, 26
    %v1167 = vshll.u32 %v1135, 26
    %v1168 = vshll.u32 %v1136, 26
    %v1169 = vshll.u32 %v1137, 26
    %v1170 = vshll.u32 %v1138, 26
    %v1171 = vshll.u32 %v1139, 26
    %v1172 = vshll.u32 %v1140, 26
    %v1173 = vshll.u32 %v1141, 26
    %v1174 = vshll.u32 %v1142, 26
    %v1175 = vshll.u32 %v1143, 26
    %v1176 = vshra.s32 %v1128, 6
    %v1177 = vshra.s32 %v1129, 6
    %v1178 = vshra.s32 %v1130, 6
    %v1179 = vshra.s32 %v1131, 6
    %v1180 = vshra.s32 %v1132, 6
    %v1181 = vshra.s32 %v1133, 6
    %v1182 = vshra.s32 %v1134, 6
    %v1183 = vshra.s32 %v1135, 6
    %v1184 = vshra.s32 %v1136, 6
    %v1185 = vshra.s32 %v1137, 6
    %v1186 = vshra.s32 %v1138, 6
    %v1187 = vshra.s32 %v1139, 6
    %v1188 = vshra.s32 %v1140, 6
    %v1189 = vshra.s32 %v1141, 6
    %v1190 = vshra.s32 %v1142, 6
    %v1191 = vshra.s32 %v1143, 6
    %v1192 = vand.u32 %v1176, 67108863
    %v1193 = vand.u32 %v1177, 67108863
    %v1194 = vand.u32 %v1178, 67108863
    %v1195 = vand.u32 %v1179, 67108863
    %v1196 = vand.u32 %v1180, 67108863
    %v1197 = vand.u32 %v1181, 67108863
    %v1198 = vand.u32 %v1182, 67108863
    %v1199 = vand.u32 %v1183, 67108863
    %v1200 = vand.u32 %v1184, 67108863
    %v1201 = vand.u32 %v1185, 67108863
    %v1202 = vand.u32 %v1186, 67108863
    %v1203 = vand.u32 %v1187, 67108863
    %v1204 = vand.u32 %v1188, 67108863
    %v1205 = vand.u32 %v1189, 67108863
    %v1206 = vand.u32 %v1190, 67108863
    %v1207 = vand.u32 %v1191, 67108863
    %v1208 = vor.u32 %v1160, %v1192
    %v1209 = vor.u32 %v1161, %v1193
    %v1210 = vor.u32 %v1162, %v1194
    %v1211 = vor.u32 %v1163, %v1195
    %v1212 = vor.u32 %v1164, %v1196
    %v1213 = vor.u32 %v1165, %v1197
    %v1214 = vor.u32 %v1166, %v1198
    %v1215 = vor.u32 %v1167, %v1199
    %v1216 = vor.u32 %v1168, %v1200
    %v1217 = vor.u32 %v1169, %v1201
    %v1218 = vor.u32 %v1170, %v1202
    %v1219 = vor.u32 %v1171, %v1203
    %v1220 = vor.u32 %v1172, %v1204
    %v1221 = vor.u32 %v1173, %v1205
    %v1222 = vor.u32 %v1174, %v1206
    %v1223 = vor.u32 %v1175, %v1207
    %v1224 = vxor.u32 %v1208, %v1144
    %v1225 = vxor.u32 %v1209, %v1145
    %v1226 = vxor.u32 %v1210, %v1146
    %v1227 = vxor.u32 %v1211, %v1147
    %v1228 = vxor.u32 %v1212, %v1148
    %v1229 = vxor.u32 %v1213, %v1149
    %v1230 = vxor.u32 %v1214, %v1150
    %v1231 = vxor.u32 %v1215, %v1151
    %v1232 = vxor.u32 %v1216, %v1152
    %v1233 = vxor.u32 %v1217, %v1153
    %v1234 = vxor.u32 %v1218, %v1154
    %v1235 = vxor.u32 %v1219, %v1155
    %v1236 = vxor.u32 %v1220, %v1156
    %v1237 = vxor.u32 %v1221, %v1157
    %v1238 = vxor.u32 %v1222, %v1158
    %v1239 = vxor.u32 %v1223, %v1159
    %v1240 = vadd.s32 %v1144, %v1224
    %v1241 = vadd.s32 %v1145, %v1225
    %v1242 = vadd.s32 %v1146, %v1226
    %v1243 = vadd.s32 %v1147, %v1227
    %v1244 = vadd.s32 %v1148, %v1228
    %v1245 = vadd.s32 %v1149, %v1229
    %v1246 = vadd.s32 %v1150, %v1230
    %v1247 = vadd.s32 %v1151, %v1231
    %v1248 = vadd.s32 %v1152, %v1232
    %v1249 = vadd.s32 %v1153, %v1233
    %v1250 = vadd.s32 %v1154, %v1234
    %v1251 = vadd.s32 %v1155, %v1235
    %v1252 = vadd.s32 %v1156, %v1236
    %v1253 = vadd.s32 %v1157, %v1237
    %v1254 = vadd.s32 %v1158, %v1238
    %v1255 = vadd.s32 %v1159, %v1239
    %v1256 = vshll.u32 %v1224, 6
    %v1257 = vshll.u32 %v1225, 6
    %v1258 = vshll.u32 %v1226, 6
    %v1259 = vshll.u32 %v1227, 6
    %v1260 = vshll.u32 %v1228, 6
    %v1261 = vshll.u32 %v1229, 6
    %v1262 = vshll.u32 %v1230, 6
    %v1263 = vshll.u32 %v1231, 6
    %v1264 = vshll.u32 %v1232, 6
    %v1265 = vshll.u32 %v1233, 6
    %v1266 = vshll.u32 %v1234, 6
    %v1267 = vshll.u32 %v1235, 6
    %v1268 = vshll.u32 %v1236, 6
    %v1269 = vshll.u32 %v1237, 6
    %v1270 = vshll.u32 %v1238, 6
    %v1271 = vshll.u32 %v1239, 6
    %v1272 = vshra.s32 %v1224, 26
    %v1273 = vshra.s32 %v1225, 26
    %v1274 = vshra.s32 %v1226, 26
    %v1275 = vshra.s32 %v1227, 26
    %v1276 = vshra.s32 %v1228, 26
    %v1277 = vshra.s32 %v1229, 26
    %v1278 = vshra.s32 %v1230, 26
    %v1279 = vshra.s32 %v1231, 26
    %v1280 = vshra.s32 %v1232, 26
    %v1281 = vshra.s32 %v1233, 26
    %v1282 = vshra.s32 %v1234, 26
    %v1283 = vshra.s32 %v1235, 26
    %v1284 = vshra.s32 %v1236, 26
    %v1285 = vshra.s32 %v1237, 26
    %v1286 = vshra.s32 %v1238, 26
    %v1287 = vshra.s32 %v1239, 26
    %v1288 = vand.u32 %v1272, 63
    %v1289 = vand.u32 %v1273, 63
    %v1290 = vand.u32 %v1274, 63
    %v1291 = vand.u32 %v1275, 63
    %v1292 = vand.u32 %v1276, 63
    %v1293 = vand.u32 %v1277, 63
    %v1294 = vand.u32 %v1278, 63
    %v1295 = vand.u32 %v1279, 63
    %v1296 = vand.u32 %v1280, 63
    %v1297 = vand.u32 %v1281, 63
    %v1298 = vand.u32 %v1282, 63
    %v1299 = vand.u32 %v1283, 63
    %v1300 = vand.u32 %v1284, 63
    %v1301 = vand.u32 %v1285, 63
    %v1302 = vand.u32 %v1286, 63
    %v1303 = vand.u32 %v1287, 63
    %v1304 = vor.u32 %v1256, %v1288
    %v1305 = vor.u32 %v1257, %v1289
    %v1306 = vor.u32 %v1258, %v1290
    %v1307 = vor.u32 %v1259, %v1291
    %v1308 = vor.u32 %v1260, %v1292
    %v1309 = vor.u32 %v1261, %v1293
    %v1310 = vor.u32 %v1262, %v1294
    %v1311 = vor.u32 %v1263, %v1295
    %v1312 = vor.u32 %v1264, %v1296
    %v1313 = vor.u32 %v1265, %v1297
    %v1314 = vor.u32 %v1266, %v1298
    %v1315 = vor.u32 %v1267, %v1299
    %v1316 = vor.u32 %v1268, %v1300
    %v1317 = vor.u32 %v1269, %v1301
    %v1318 = vor.u32 %v1270, %v1302
    %v1319 = vor.u32 %v1271, %v1303
    %v1320 = vxor.u32 %v1304, %v1240
    %v1321 = vxor.u32 %v1305, %v1241
    %v1322 = vxor.u32 %v1306, %v1242
    %v1323 = vxor.u32 %v1307, %v1243
    %v1324 = vxor.u32 %v1308, %v1244
    %v1325 = vxor.u32 %v1309, %v1245
    %v1326 = vxor.u32 %v1310, %v1246
    %v1327 = vxor.u32 %v1311, %v1247
    %v1328 = vxor.u32 %v1312, %v1248
    %v1329 = vxor.u32 %v1313, %v1249
    %v1330 = vxor.u32 %v1314, %v1250
    %v1331 = vxor.u32 %v1315, %v1251
    %v1332 = vxor.u32 %v1316, %v1252
    %v1333 = vxor.u32 %v1317, %v1253
    %v1334 = vxor.u32 %v1318, %v1254
    %v1335 = vxor.u32 %v1319, %v1255
    %v1336 = vadd.s32 %v1240, %v48
    %v1337 = vadd.s32 %v1241, %v48
    %v1338 = vadd.s32 %v1242, %v48
    %v1339 = vadd.s32 %v1243, %v48
    %v1340 = vadd.s32 %v1244, %v48
    %v1341 = vadd.s32 %v1245, %v48
    %v1342 = vadd.s32 %v1246, %v48
    %v1343 = vadd.s32 %v1247, %v48
    %v1344 = vadd.s32 %v1248, %v48
    %v1345 = vadd.s32 %v1249, %v48
    %v1346 = vadd.s32 %v1250, %v48
    %v1347 = vadd.s32 %v1251, %v48
    %v1348 = vadd.s32 %v1252, %v48
    %v1349 = vadd.s32 %v1253, %v48
    %v1350 = vadd.s32 %v1254, %v48
    %v1351 = vadd.s32 %v1255, %v48
    %v1352 = vadd.s32 %v1320, %v50
    %v1353 = vadd.s32 %v1321, %v50
    %v1354 = vadd.s32 %v1322, %v50
    %v1355 = vadd.s32 %v1323, %v50
    %v1356 = vadd.s32 %v1324, %v50
    %v1357 = vadd.s32 %v1325, %v50
    %v1358 = vadd.s32 %v1326, %v50
    %v1359 = vadd.s32 %v1327, %v50
    %v1360 = vadd.s32 %v1328, %v50
    %v1361 = vadd.s32 %v1329, %v50
    %v1362 = vadd.s32 %v1330, %v50
    %v1363 = vadd.s32 %v1331, %v50
    %v1364 = vadd.s32 %v1332, %v50
    %v1365 = vadd.s32 %v1333, %v50
    %v1366 = vadd.s32 %v1334, %v50
    %v1367 = vadd.s32 %v1335, %v50
    %v1368 = vadd.s32 %v1352, 3
    %v1369 = vadd.s32 %v1353, 3
    %v1370 = vadd.s32 %v1354, 3
    %v1371 = vadd.s32 %v1355, 3
    %v1372 = vadd.s32 %v1356, 3
    %v1373 = vadd.s32 %v1357, 3
    %v1374 = vadd.s32 %v1358, 3
    %v1375 = vadd.s32 %v1359, 3
    %v1376 = vadd.s32 %v1360, 3
    %v1377 = vadd.s32 %v1361, 3
    %v1378 = vadd.s32 %v1362, 3
    %v1379 = vadd.s32 %v1363, 3
    %v1380 = vadd.s32 %v1364, 3
    %v1381 = vadd.s32 %v1365, 3
    %v1382 = vadd.s32 %v1366, 3
    %v1383 = vadd.s32 %v1367, 3
    %v1384 = vxor.u32 %v1336, %v1368
    %v1385 = vxor.u32 %v1337, %v1369
    %v1386 = vxor.u32 %v1338, %v1370
    %v1387 = vxor.u32 %v1339, %v1371
    %v1388 = vxor.u32 %v1340, %v1372
    %v1389 = vxor.u32 %v1341, %v1373
    %v1390 = vxor.u32 %v1342, %v1374
    %v1391 = vxor.u32 %v1343, %v1375
    %v1392 = vxor.u32 %v1344, %v1376
    %v1393 = vxor.u32 %v1345, %v1377
    %v1394 = vxor.u32 %v1346, %v1378
    %v1395 = vxor.u32 %v1347, %v1379
    %v1396 = vxor.u32 %v1348, %v1380
    %v1397 = vxor.u32 %v1349, %v1381
    %v1398 = vxor.u32 %v1350, %v1382
    %v1399 = vxor.u32 %v1351, %v1383
    %v1400 = vand.u32 %v1384, 4294967168
    %v1401 = vand.u32 %v1385, 4294967168
    %v1402 = vand.u32 %v1386, 4294967168
    %v1403 = vand.u32 %v1387, 4294967168
    %v1404 = vand.u32 %v1388, 4294967168
    %v1405 = vand.u32 %v1389, 4294967168
    %v1406 = vand.u32 %v1390, 4294967168
    %v1407 = vand.u32 %v1391, 4294967168
    %v1408 = vand.u32 %v1392, 4294967168
    %v1409 = vand.u32 %v1393, 4294967168
    %v1410 = vand.u32 %v1394, 4294967168
    %v1411 = vand.u32 %v1395, 4294967168
    %v1412 = vand.u32 %v1396, 4294967168
    %v1413 = vand.u32 %v1397, 4294967168
    %v1414 = vand.u32 %v1398, 4294967168
    %v1415 = vand.u32 %v1399, 4294967168
    %v1416 = vor.u32 %v1400, %v30
    %v1417 = vor.u32 %v1401, %v31
    %v1418 = vor.u32 %v1402, %v32
    %v1419 = vor.u32 %v1403, %v33
    %v1420 = vor.u32 %v1404, %v34
    %v1421 = vor.u32 %v1405, %v35
    %v1422 = vor.u32 %v1406, %v36
    %v1423 = vor.u32 %v1407, %v37
    %v1424 = vor.u32 %v1408, %v38
    %v1425 = vor.u32 %v1409, %v39
    %v1426 = vor.u32 %v1410, %v40
    %v1427 = vor.u32 %v1411, %v41
    %v1428 = vor.u32 %v1412, %v42
    %v1429 = vor.u32 %v1413, %v43
    %v1430 = vor.u32 %v1414, %v44
    %v1431 = vor.u32 %v1415, %v45
    %vm1432 = vcmp.gt.s32.totalorder %v1416, %v135
    %vm1433 = vcmp.gt.s32.totalorder %v1417, %v135
    %vm1434 = vcmp.gt.s32.totalorder %v1418, %v135
    %vm1435 = vcmp.gt.s32.totalorder %v1419, %v135
    %vm1436 = vcmp.gt.s32.totalorder %v1420, %v135
    %vm1437 = vcmp.gt.s32.totalorder %v1421, %v135
    %vm1438 = vcmp.gt.s32.totalorder %v1422, %v135
    %vm1439 = vcmp.gt.s32.totalorder %v1423, %v135
    %vm1440 = vcmp.gt.s32.totalorder %v1424, %v135
    %vm1441 = vcmp.gt.s32.totalorder %v1425, %v135
    %vm1442 = vcmp.gt.s32.totalorder %v1426, %v135
    %vm1443 = vcmp.gt.s32.totalorder %v1427, %v135
    %vm1444 = vcmp.gt.s32.totalorder %v1428, %v135
    %vm1445 = vcmp.gt.s32.totalorder %v1429, %v135
    %vm1446 = vcmp.gt.s32.totalorder %v1430, %v135
    %vm1447 = vcmp.gt.s32.totalorder %v1431, %v135
    %v1448 = vsel %vm1432, 1, 0
    %v1449 = vsel %vm1433, 1, 0
    %v1450 = vsel %vm1434, 1, 0
    %v1451 = vsel %vm1435, 1, 0
    %v1452 = vsel %vm1436, 1, 0
    %v1453 = vsel %vm1437, 1, 0
    %v1454 = vsel %vm1438, 1, 0
    %v1455 = vsel %vm1439, 1, 0
    %v1456 = vsel %vm1440, 1, 0
    %v1457 = vsel %vm1441, 1, 0
    %v1458 = vsel %vm1442, 1, 0
    %v1459 = vsel %vm1443, 1, 0
    %v1460 = vsel %vm1444, 1, 0
    %v1461 = vsel %vm1445, 1, 0
    %v1462 = vsel %vm1446, 1, 0
    %v1463 = vsel %vm1447, 1, 0
    %v1464 = vadd.s32 %v1448, %v1452
    %v1465 = vadd.s32 %v1449, %v1453
    %v1466 = vadd.s32 %v1450, %v1454
    %v1467 = vadd.s32 %v1451, %v1455
    %v1468 = vadd.s32 %v1464, %v1456
    %v1469 = vadd.s32 %v1465, %v1457
    %v1470 = vadd.s32 %v1466, %v1458
    %v1471 = vadd.s32 %v1467, %v1459
    %v1472 = vadd.s32 %v1468, %v1460
    %v1473 = vadd.s32 %v1469, %v1461
    %v1474 = vadd.s32 %v1470, %v1462
    %v1475 = vadd.s32 %v1471, %v1463
    %v1476 = vadd.s32 %v1472, %v1473
    %v1477 = vadd.s32 %v1474, %v1475
    %v1478 = vadd.s32 %v1476, %v1477
    %v1479 = vrot.slane %v1478, 4
    %v1480 = vadd.s32 %v1478, %v1479
    %v1481 = vrot.slane %v1480, 2
    %v1482 = vadd.s32 %v1480, %v1481
    %v1483 = vrot.slane %v1482, 1
    %v1484 = vadd.s32 %v1482, %v1483
    %vm1485 = vcmp.lt.s32.totalorder %v1484, 96
    %vm1486 = vmpackc.low %vm1485, %vm1485
    %vm1487 = vmpackc.even %vm1486, %vm1486
    %v1488 = vsel %vm1487, 16843009, 0
    %vm1489 = vcmask 1040384
    %vm1490 = vsmask.f32 0
    %vm1491 = vmand %vm1489, %vm1490
    %v1492 = vld [vmem:[%s1] sm:$0x1]
    %v1493 = vsel %vm1491, %v1488, %v1492
    %1494 = vst [vmem:[%s1] sm:$0x1] %v1493
    // Predicated region
    $region10: #{mask_generator_forward.1} parent=1 // pred_check
      _
    $region11: #{mask_generator_forward.1} parent=1 // pred_check_branch
      %1496 = sbr.rel (0) target = $region13
    $region12: #{mask_generator_forward.1} parent=1 // pred_region
      _
    $region13: #{mask_generator_forward.1} parent=1 // pred_fallthru
      _
    // Predicated region
    $region14: #{mask_generator_forward.1} parent=1 // pred_check
      _
    $region15: #{mask_generator_forward.1} parent=1 // pred_check_branch
      %1498 = sbr.rel (0) target = $region17
    $region16: #{mask_generator_forward.1} parent=1 // pred_region
      _
    $region17: #{mask_generator_forward.1} parent=1 // pred_fallthru
      _
    %1499 = vsyncpa [#allocation3], 1

</llo_original>
